<compile_context>
chip_gen: v6e
topology: v6e:2x2x1
jax: 0.10.0
libtpu: 0.0.40
codegen_flags: <defaults>
</compile_context>

<pallas_src>
import functools

import jax
import jax.numpy as jnp
from jax import lax
from jax.experimental import pallas as pl
from jax.experimental.pallas import tpu as pltpu


def _round_up(x, m):
    return ((x + m - 1) // m) * m


# -----------------------------------------------------------------------------
# Fused kernel: per-chunk input projection + LSTM recurrence + final FC/sigmoid
# -----------------------------------------------------------------------------
def _candle_lstm_kernel(
    x_ref,       # [Tc*Bp, E]   bf16  time-major activation chunk (pipelined)
    wih_hbm,     # [E, 4Hp]     bf16  (memory_space=ANY; staged once to VMEM)
    whh_hbm,     # [Hp, 4Hp]    bf16  (memory_space=ANY; staged once to VMEM)
    b_ref,       # [1, 4Hp]     f32   b_ih + b_hh, gate-padded / permuted
    wfc_ref,     # [Hp, O]      f32
    bfc_ref,     # [1, O]       f32
    out_ref,     # [Bp, O]      f32
    gx_scr,      # VMEM [Tc*Bp, 4Hp] f32   per-chunk gate slab
    h_scr,       # VMEM [Bp, Hp] f32       carried hidden state
    c_scr,       # VMEM [Bp, Hp] f32       carried cell state
    wih_vmem,    # VMEM [E, 4Hp]  bf16     staged W_ih (single buffer)
    whh_vmem,    # VMEM [Hp, 4Hp] bf16     staged W_hh (single buffer)
    dma_sem,     # DMA semaphores (2,)
    *, hidden_p, t_chunk, batch_p, seq_len, unroll):
    Hp, Tc, Bp = hidden_p, t_chunk, batch_p
    c_idx = pl.program_id(0)

    @pl.when(c_idx == 0)
    def _init():
        # Zero the carried state and stage the constant weights exactly once
        # (single-buffered VMEM copies instead of the pipeline's double buffers).
        h_scr[...] = jnp.zeros_like(h_scr)
        c_scr[...] = jnp.zeros_like(c_scr)
        cp_ih = pltpu.make_async_copy(wih_hbm, wih_vmem, dma_sem.at[0])
        cp_hh = pltpu.make_async_copy(whh_hbm, whh_vmem, dma_sem.at[1])
        cp_ih.start()
        cp_hh.start()
        cp_ih.wait()
        cp_hh.wait()

    # ---- hoisted input projection for this chunk: one big MXU matmul ----
    gx_scr[...] = (
        jnp.dot(x_ref[...], wih_vmem[...], preferred_element_type=jnp.float32)
        + b_ref[...])

    ragged = (seq_len % Tc) != 0
    chunk_start = c_idx * Tc

    def step(t, carry):
        h, c = carry                                  # f32 vreg carries
        row = pl.multiple_of(t * Bp, Bp)
        gates = gx_scr[pl.ds(row, Bp), :] + jnp.dot(
            h.astype(jnp.bfloat16), whh_vmem[...],
            preferred_element_type=jnp.float32)
        # gate order (i, f, o, g): one sigmoid over a contiguous 3*Hp slab
        sig = jax.nn.sigmoid(gates[:, :3 * Hp])
        i_g = sig[:, 0 * Hp:1 * Hp]
        f_g = sig[:, 1 * Hp:2 * Hp]
        o_g = sig[:, 2 * Hp:3 * Hp]
        g_g = jnp.tanh(gates[:, 3 * Hp:])
        c_new = f_g * c + i_g * g_g
        h_new = o_g * jnp.tanh(c_new)
        if ragged:                                    # mask past-the-end steps
            valid = (chunk_start + t) < seq_len
            h_new = jnp.where(valid, h_new, h)
            c_new = jnp.where(valid, c_new, c)
        return h_new, c_new

    h, c = lax.fori_loop(0, Tc, step, (h_scr[...], c_scr[...]), unroll=unroll)
    h_scr[...] = h
    c_scr[...] = c

    @pl.when(c_idx == pl.num_programs(0) - 1)
    def _finalize():
        logits = jnp.dot(h, wfc_ref[...],
                         preferred_element_type=jnp.float32) + bfc_ref[...]
        out_ref[...] = jax.nn.sigmoid(logits)


# -----------------------------------------------------------------------------
# Wrapper
# -----------------------------------------------------------------------------
def candle_lstm_forward(tokens, params, *, max_t_chunk=128,
                        vmem_budget_bytes=24 * 1024 * 1024):
    """tokens: int32 [B, T]; params use PyTorch layouts. Returns f32 [B, O]."""
    emb = params["embedding"]    # [V, E]
    w_ih = params["w_ih"]        # [4H, E]   torch gate order (i, f, g, o)
    w_hh = params["w_hh"]        # [4H, H]
    b_ih = params["b_ih"]        # [4H]
    b_hh = params["b_hh"]        # [4H]
    w_fc = params["w_fc"]        # [O, H]
    b_fc = params["b_fc"]        # [O]

    B, T = tokens.shape
    E = emb.shape[1]
    H = w_hh.shape[1]
    O = w_fc.shape[0]

    Bp = _round_up(B, 16)        # sublane-aligned batch (16 for bf16 packing)
    Hp = _round_up(H, 128)       # lane-aligned hidden per gate block

    # ---- pack / pad weights. Per-gate blocks padded H -> Hp with zeros (padded hidden
    #      units provably stay zero through the recurrence) and permuted from torch
    #      (i, f, g, o) to kernel order (i, f, o, g). ----
    gate_perm = jnp.array([0, 1, 3, 2], dtype=jnp.int32)

    def pack_gate_rows(w):                            # [4H, X] -> [4Hp, X]
        wg = w.reshape(4, H, -1)[gate_perm]
        wg = jnp.pad(wg, ((0, 0), (0, Hp - H), (0, 0)))
        return wg.reshape(4 * Hp, -1)

    w_ih_p = pack_gate_rows(w_ih).T.astype(jnp.bfloat16)               # [E, 4Hp]
    w_hh_p = jnp.pad(pack_gate_rows(w_hh), ((0, 0), (0, Hp - H)))      # [4Hp, Hp]
    w_hh_p = w_hh_p.T.astype(jnp.bfloat16)                             # [Hp, 4Hp]
    b_p = pack_gate_rows((b_ih + b_hh)[:, None]).reshape(1, 4 * Hp)
    b_p = b_p.astype(jnp.float32)                                      # [1, 4Hp]
    w_fc_p = jnp.pad(w_fc, ((0, 0), (0, Hp - H))).T.astype(jnp.float32)  # [Hp, O]
    b_fc_p = b_fc.reshape(1, O).astype(jnp.float32)                    # [1, O]

    # ---- embedding gather straight into a time-major layout (no extra XLA
    #      [B,T,E] -> [T,B,E] transpose pass over the large activation). ----
    x_tm = jnp.take(emb, tokens.T, axis=0)                             # [T, B, E]
    x_tm = jnp.pad(x_tm, ((0, 0), (0, Bp - B), (0, 0)))                # [T, Bp, E]
    x_flat = x_tm.reshape(T * Bp, E).astype(jnp.bfloat16)              # [T*Bp, E]

    # ---- VMEM-budgeted time-chunk size (fits default scoped VMEM on v5e/v6e and
    #      v7x's 64 MiB physical VMEM). ----
    bytes_fixed = (
        E * 4 * Hp * 2              # W_ih stage (single-buffered VMEM scratch)
        + Hp * 4 * Hp * 2           # W_hh stage (single-buffered VMEM scratch)
        + 2 * Hp * O * 4            # W_fc (double-buffered pipeline block)
        + 2 * 4 * Hp * 4            # bias (double-buffered)
        + 2 * Bp * Hp * 4           # h, c scratch
        + 2 * Bp * O * 4)           # output block
    bytes_per_t = Bp * (2 * E * 2 + 4 * Hp * 4)   # 2-buf bf16 x chunk + f32 gate slab
    tc_cap = (vmem_budget_bytes - bytes_fixed) // bytes_per_t
    Tc = int(max(1, min(T, max_t_chunk, tc_cap)))
    n_chunks = pl.cdiv(T, Tc)

    est_vmem = bytes_fixed + bytes_per_t * Tc
    vmem_limit = 32 * 1024 * 1024                 # safe default on v5e/v6e/v7x
    if est_vmem > vmem_limit - 4 * 1024 * 1024:
        vmem_limit = int(min(est_vmem + 8 * 1024 * 1024, 60 * 1024 * 1024))

    # unroll sized by per-step live vreg footprint (h, c and the f32 gates slab)
    step_live_bytes = Bp * Hp * 4 * 2 + Bp * 4 * Hp * 4
    if step_live_bytes <= 48 * 1024:
        unroll = 8
    elif step_live_bytes <= 128 * 1024:
        unroll = 4
    else:
        unroll = 2
    unroll = max(1, min(unroll, Tc))

    kernel = functools.partial(
        _candle_lstm_kernel, hidden_p=Hp, t_chunk=Tc, batch_p=Bp,
        seq_len=T, unroll=unroll)

    out_p = pl.pallas_call(
        kernel,
        out_shape=jax.ShapeDtypeStruct((Bp, O), jnp.float32),
        grid_spec=pltpu.PrefetchScalarGridSpec(
            num_scalar_prefetch=0,
            grid=(n_chunks,),                       # serial time-chunk axis
            in_specs=[
                pl.BlockSpec((Tc * Bp, E), lambda c: (c, 0)),     # x chunk
                pl.BlockSpec(memory_space=pl.ANY),                # W_ih (staged)
                pl.BlockSpec(memory_space=pl.ANY),                # W_hh (staged)
                pl.BlockSpec((1, 4 * Hp), lambda c: (0, 0)),      # bias
                pl.BlockSpec((Hp, O), lambda c: (0, 0)),          # W_fc
                pl.BlockSpec((1, O), lambda c: (0, 0)),           # b_fc
            ],
            out_specs=pl.BlockSpec((Bp, O), lambda c: (0, 0)),
            scratch_shapes=[
                pltpu.VMEM((Tc * Bp, 4 * Hp), jnp.float32),       # gate slab
                pltpu.VMEM((Bp, Hp), jnp.float32),                # h
                pltpu.VMEM((Bp, Hp), jnp.float32),                # c
                pltpu.VMEM((E, 4 * Hp), jnp.bfloat16),            # W_ih stage
                pltpu.VMEM((Hp, 4 * Hp), jnp.bfloat16),           # W_hh stage
                pltpu.SemaphoreType.DMA((2,)),
            ],
        ),
        compiler_params=pltpu.CompilerParams(
            dimension_semantics=("arbitrary",),     # chunks carry h/c state
            vmem_limit_bytes=int(vmem_limit),
        ),
    )(x_flat, w_ih_p, w_hh_p, b_p, w_fc_p, b_fc_p)

    # TODO(synk): on 2-TensorCore parts (v7x) add a leading "parallel" batch-tile
    # grid axis when B is large; on single-TC v5e/v6e it would only serialize work.
    return out_p[:B]


# -----------------------------------------------------------------------------
# Pure-JAX reference (mirrors torch.nn.Embedding -> LSTM -> Linear -> Sigmoid)
# -----------------------------------------------------------------------------
def candle_lstm_reference(tokens, params):
    emb = params["embedding"]
    H = params["w_hh"].shape[1]
    x = jnp.take(emb, tokens, axis=0)                                  # [B, T, E]

    def cell(carry, x_t):
        h, c = carry
        gates = (x_t @ params["w_ih"].T + params["b_ih"]
                 + h @ params["w_hh"].T + params["b_hh"])
        i, f, g, o = jnp.split(gates, 4, axis=-1)
        i = jax.nn.sigmoid(i)
        f = jax.nn.sigmoid(f)
        g = jnp.tanh(g)
        o = jax.nn.sigmoid(o)
        c = f * c + i * g
        h = o * jnp.tanh(c)
        return (h, c), None

    B = tokens.shape[0]
    h0 = jnp.zeros((B, H), jnp.float32)
    c0 = jnp.zeros((B, H), jnp.float32)
    (h_last, _), _ = lax.scan(cell, (h0, c0), jnp.swapaxes(x, 0, 1))
    return jax.nn.sigmoid(h_last @ params["w_fc"].T + params["b_fc"])


def init_params(key, vocab_size, embedding_dim, hidden_dim, output_dim):
    ks = jax.random.split(key, 7)
    bound = 1.0 / jnp.sqrt(hidden_dim)
    return {
        "embedding": jax.random.normal(
            ks[0], (vocab_size, embedding_dim), jnp.float32),
        "w_ih": jax.random.uniform(
            ks[1], (4 * hidden_dim, embedding_dim), jnp.float32, -bound, bound),
        "w_hh": jax.random.uniform(
            ks[2], (4 * hidden_dim, hidden_dim), jnp.float32, -bound, bound),
        "b_ih": jax.random.uniform(
            ks[3], (4 * hidden_dim,), jnp.float32, -bound, bound),
        "b_hh": jax.random.uniform(
            ks[4], (4 * hidden_dim,), jnp.float32, -bound, bound),
        "w_fc": jax.random.uniform(
            ks[5], (output_dim, hidden_dim), jnp.float32, -bound, bound),
        "b_fc": jax.random.uniform(
            ks[6], (output_dim,), jnp.float32, -bound, bound),
    }


if __name__ == "__main__":
    # small shapes consistent with the module
    VOCAB, EMB, HID, OUT = 32, 16, 32, 4
    B, T = 2, 8

    key = jax.random.PRNGKey(0)
    k_par, k_tok = jax.random.split(key)
    params = init_params(k_par, VOCAB, EMB, HID, OUT)
    tokens = jax.random.randint(k_tok, (B, T), 0, VOCAB, dtype=jnp.int32)

    out = jax.jit(candle_lstm_forward)(tokens, params)
    out = jax.block_until_ready(out)
    assert out.shape == (B, OUT)

    ref = candle_lstm_reference(tokens, params)
    max_err = float(jnp.max(jnp.abs(out - ref)))
    assert max_err < 2e-2, f"max abs err vs reference: {max_err}"

    # also exercise the multi-chunk / ragged-T path (T=8 with Tc=3 -> chunks 3+3+2)
    out_ragged = jax.jit(
        functools.partial(candle_lstm_forward, max_t_chunk=3))(tokens, params)
    out_ragged = jax.block_until_ready(out_ragged)
    max_err_r = float(jnp.max(jnp.abs(out_ragged - ref)))
    assert max_err_r < 2e-2, f"ragged-path max abs err vs reference: {max_err_r}"

    print("KERNEL_OK")
</pallas_src>

<mosaic_0001>
module attributes {stable_mosaic.version = 11 : i64} {
  func.func @_candle_lstm_kernel(%arg0: i32, %arg1: memref<128x16xbf16, #tpu.memory_space<vmem>>, %arg2: memref<16x512xbf16, #tpu.memory_space<any>>, %arg3: memref<128x512xbf16, #tpu.memory_space<any>>, %arg4: memref<1x512xf32, #tpu.memory_space<vmem>>, %arg5: memref<128x4xf32, #tpu.memory_space<vmem>>, %arg6: memref<1x4xf32, #tpu.memory_space<vmem>>, %arg7: memref<16x4xf32, #tpu.memory_space<vmem>>, %arg8: memref<128x512xf32, #tpu.memory_space<vmem>>, %arg9: memref<16x128xf32, #tpu.memory_space<vmem>>, %arg10: memref<16x128xf32, #tpu.memory_space<vmem>>, %arg11: memref<16x512xbf16, #tpu.memory_space<vmem>>, %arg12: memref<128x512xbf16, #tpu.memory_space<vmem>>, %arg13: memref<2x!tpu.dma_semaphore, #tpu.memory_space<semaphore_mem>>) attributes {dimension_semantics = [#tpu.dimension_semantics<arbitrary>], iteration_bounds = array<i64: 1>, scalar_prefetch = 0 : i64, scratch_operands = 6 : i64, tpu.core_type = #tpu.core_type<tc>, window_params = [{transform_indices = @transform_0, window_bounds = array<i64: 128, 16>}, {}, {}, {pipeline_mode = #tpu.pipeline_mode<synchronous>, transform_indices = @transform_3, window_bounds = array<i64: 1, 512>}, {pipeline_mode = #tpu.pipeline_mode<synchronous>, transform_indices = @transform_4, window_bounds = array<i64: 128, 4>}, {pipeline_mode = #tpu.pipeline_mode<synchronous>, transform_indices = @transform_5, window_bounds = array<i64: 1, 4>}, {pipeline_mode = #tpu.pipeline_mode<synchronous>, transform_indices = @transform_6, window_bounds = array<i64: 16, 4>}]} {
    %c0_i32 = arith.constant 0 : i32
    %0 = arith.cmpi eq, %arg0, %c0_i32 : i32
    %1 = arith.extui %0 : i1 to i32
    %c0_i32_0 = arith.constant 0 : i32
    %2 = arith.cmpi ne, %1, %c0_i32_0 : i32
    scf.if %2 {
      %cst_66 = arith.constant 0.000000e+00 : f32
      %209 = vector.broadcast %cst_66 : f32 to vector<16x128xf32>
      %c0_67 = arith.constant 0 : index
      %c0_68 = arith.constant 0 : index
      %210 = vector.load %arg9[%c0_67, %c0_68] : memref<16x128xf32, #tpu.memory_space<vmem>>, vector<16x128xf32>
      tpu.vector_store %arg9[%c0_67, %c0_68], %209 {strides = array<i32>} : memref<16x128xf32, #tpu.memory_space<vmem>>, vector<16x128xf32>,
      %cst_69 = arith.constant 0.000000e+00 : f32
      %211 = vector.broadcast %cst_69 : f32 to vector<16x128xf32>
      %c0_70 = arith.constant 0 : index
      %c0_71 = arith.constant 0 : index
      %212 = vector.load %arg10[%c0_70, %c0_71] : memref<16x128xf32, #tpu.memory_space<vmem>>, vector<16x128xf32>
      tpu.vector_store %arg10[%c0_70, %c0_71], %211 {strides = array<i32>} : memref<16x128xf32, #tpu.memory_space<vmem>>, vector<16x128xf32>,
      %c0_i32_72 = arith.constant 0 : i32
      %213 = tpu.memref_slice %arg13[%c0_i32_72] : memref<2x!tpu.dma_semaphore, #tpu.memory_space<semaphore_mem>> -> memref<1x!tpu.dma_semaphore, #tpu.memory_space<semaphore_mem>>
      %214 = tpu.memref_squeeze %213 : memref<1x!tpu.dma_semaphore, #tpu.memory_space<semaphore_mem>> -> memref<!tpu.dma_semaphore, #tpu.memory_space<semaphore_mem>>
      tpu.enqueue_dma source(%arg2 : memref<16x512xbf16, #tpu.memory_space<any>>) target(%arg11 : memref<16x512xbf16, #tpu.memory_space<vmem>>) target_semaphore(%214 : memref<!tpu.dma_semaphore, #tpu.memory_space<semaphore_mem>>)
      %c1_i32_73 = arith.constant 1 : i32
      %215 = tpu.memref_slice %arg13[%c1_i32_73] : memref<2x!tpu.dma_semaphore, #tpu.memory_space<semaphore_mem>> -> memref<1x!tpu.dma_semaphore, #tpu.memory_space<semaphore_mem>>
      %216 = tpu.memref_squeeze %215 : memref<1x!tpu.dma_semaphore, #tpu.memory_space<semaphore_mem>> -> memref<!tpu.dma_semaphore, #tpu.memory_space<semaphore_mem>>
      tpu.enqueue_dma source(%arg3 : memref<128x512xbf16, #tpu.memory_space<any>>) target(%arg12 : memref<128x512xbf16, #tpu.memory_space<vmem>>) target_semaphore(%216 : memref<!tpu.dma_semaphore, #tpu.memory_space<semaphore_mem>>)
      %c0_i32_74 = arith.constant 0 : i32
      %217 = tpu.memref_slice %arg13[%c0_i32_74] : memref<2x!tpu.dma_semaphore, #tpu.memory_space<semaphore_mem>> -> memref<1x!tpu.dma_semaphore, #tpu.memory_space<semaphore_mem>>
      %218 = tpu.memref_squeeze %217 : memref<1x!tpu.dma_semaphore, #tpu.memory_space<semaphore_mem>> -> memref<!tpu.dma_semaphore, #tpu.memory_space<semaphore_mem>>
      tpu.wait_dma2 semaphore(%218 : memref<!tpu.dma_semaphore, #tpu.memory_space<semaphore_mem>>) src(%arg2 : memref<16x512xbf16, #tpu.memory_space<any>>) dst(%arg11 : memref<16x512xbf16, #tpu.memory_space<vmem>>)
      %c1_i32_75 = arith.constant 1 : i32
      %219 = tpu.memref_slice %arg13[%c1_i32_75] : memref<2x!tpu.dma_semaphore, #tpu.memory_space<semaphore_mem>> -> memref<1x!tpu.dma_semaphore, #tpu.memory_space<semaphore_mem>>
      %220 = tpu.memref_squeeze %219 : memref<1x!tpu.dma_semaphore, #tpu.memory_space<semaphore_mem>> -> memref<!tpu.dma_semaphore, #tpu.memory_space<semaphore_mem>>
      tpu.wait_dma2 semaphore(%220 : memref<!tpu.dma_semaphore, #tpu.memory_space<semaphore_mem>>) src(%arg3 : memref<128x512xbf16, #tpu.memory_space<any>>) dst(%arg12 : memref<128x512xbf16, #tpu.memory_space<vmem>>)
    } else {
    }
    %c0 = arith.constant 0 : index
    %c0_1 = arith.constant 0 : index
    %3 = vector.load %arg1[%c0, %c0_1] : memref<128x16xbf16, #tpu.memory_space<vmem>>, vector<128x16xbf16>
    %c0_2 = arith.constant 0 : index
    %c0_3 = arith.constant 0 : index
    %4 = vector.load %arg11[%c0_2, %c0_3] : memref<16x512xbf16, #tpu.memory_space<vmem>>, vector<16x512xbf16>
    %cst = arith.constant dense<0.000000e+00> : vector<128x512xf32>
    %5 = tpu.matmul %3, %4, %cst {dimension_numbers = #tpu.dot_dimension_numbers<[1], [0], [0], [1], [0, 0, 1, 1], [], []>} : vector<128x16xbf16>, vector<16x512xbf16>, vector<128x512xf32> -> vector<128x512xf32>
    %c0_4 = arith.constant 0 : index
    %c0_5 = arith.constant 0 : index
    %6 = vector.load %arg4[%c0_4, %c0_5] : memref<1x512xf32, #tpu.memory_space<vmem>>, vector<1x512xf32>
    %7 = vector.broadcast %6 : vector<1x512xf32> to vector<128x512xf32>
    %8 = arith.addf %5, %7 : vector<128x512xf32>
    %c0_6 = arith.constant 0 : index
    %c0_7 = arith.constant 0 : index
    %9 = vector.load %arg8[%c0_6, %c0_7] : memref<128x512xf32, #tpu.memory_space<vmem>>, vector<128x512xf32>
    tpu.vector_store %arg8[%c0_6, %c0_7], %8 {strides = array<i32>} : memref<128x512xf32, #tpu.memory_space<vmem>>, vector<128x512xf32>,
    %c0_8 = arith.constant 0 : index
    %c0_9 = arith.constant 0 : index
    %10 = vector.load %arg9[%c0_8, %c0_9] : memref<16x128xf32, #tpu.memory_space<vmem>>, vector<16x128xf32>
    %c0_10 = arith.constant 0 : index
    %c0_11 = arith.constant 0 : index
    %11 = vector.load %arg10[%c0_10, %c0_11] : memref<16x128xf32, #tpu.memory_space<vmem>>, vector<16x128xf32>
    %c0_i32_12 = arith.constant 0 : i32
    %c16_i32 = arith.constant 16 : i32
    %12 = arith.muli %c0_i32_12, %c16_i32 : i32
    %13 = tpu.assume_multiple %12, 16 : i32
    %14 = arith.index_cast %13 : i32 to index
    %c0_13 = arith.constant 0 : index
    %15 = vector.load %arg8[%14, %c0_13] : memref<128x512xf32, #tpu.memory_space<vmem>>, vector<16x512xf32>
    %16 = arith.truncf %10 : vector<16x128xf32> to vector<16x128xbf16>
    %c0_14 = arith.constant 0 : index
    %c0_15 = arith.constant 0 : index
    %17 = vector.load %arg12[%c0_14, %c0_15] : memref<128x512xbf16, #tpu.memory_space<vmem>>, vector<128x512xbf16>
    %cst_16 = arith.constant dense<0.000000e+00> : vector<16x512xf32>
    %18 = tpu.matmul %16, %17, %cst_16 {dimension_numbers = #tpu.dot_dimension_numbers<[1], [0], [0], [1], [0, 0, 1, 1], [], []>} : vector<16x128xbf16>, vector<128x512xbf16>, vector<16x512xf32> -> vector<16x512xf32>
    %19 = arith.addf %15, %18 : vector<16x512xf32>
    %20 = vector.extract_strided_slice %19 {offsets = [0, 0], sizes = [16, 384], strides = [1, 1]} : vector<16x512xf32> to vector<16x384xf32>
    %21 = arith.negf %20 : vector<16x384xf32>
    %22 = math.exp %21 : vector<16x384xf32>
    %cst_17 = arith.constant 1.000000e+00 : f32
    %23 = vector.broadcast %cst_17 : f32 to vector<16x384xf32>
    %24 = arith.addf %23, %22 : vector<16x384xf32>
    %25 = arith.divf %23, %24 : vector<16x384xf32>
    %26 = vector.extract_strided_slice %25 {offsets = [0, 0], sizes = [16, 128], strides = [1, 1]} : vector<16x384xf32> to vector<16x128xf32>
    %27 = vector.extract_strided_slice %25 {offsets = [0, 128], sizes = [16, 128], strides = [1, 1]} : vector<16x384xf32> to vector<16x128xf32>
    %28 = vector.extract_strided_slice %25 {offsets = [0, 256], sizes = [16, 128], strides = [1, 1]} : vector<16x384xf32> to vector<16x128xf32>
    %29 = vector.extract_strided_slice %19 {offsets = [0, 384], sizes = [16, 128], strides = [1, 1]} : vector<16x512xf32> to vector<16x128xf32>
    %30 = math.tanh %29 : vector<16x128xf32>
    %31 = arith.mulf %27, %11 : vector<16x128xf32>
    %32 = arith.mulf %26, %30 : vector<16x128xf32>
    %33 = arith.addf %31, %32 : vector<16x128xf32>
    %34 = math.tanh %33 : vector<16x128xf32>
    %35 = arith.mulf %28, %34 : vector<16x128xf32>
    %c1_i32 = arith.constant 1 : i32
    %c16_i32_18 = arith.constant 16 : i32
    %36 = arith.muli %c1_i32, %c16_i32_18 : i32
    %37 = tpu.assume_multiple %36, 16 : i32
    %38 = arith.index_cast %37 : i32 to index
    %c0_19 = arith.constant 0 : index
    %39 = vector.load %arg8[%38, %c0_19] : memref<128x512xf32, #tpu.memory_space<vmem>>, vector<16x512xf32>
    %40 = arith.truncf %35 : vector<16x128xf32> to vector<16x128xbf16>
    %c0_20 = arith.constant 0 : index
    %c0_21 = arith.constant 0 : index
    %41 = vector.load %arg12[%c0_20, %c0_21] : memref<128x512xbf16, #tpu.memory_space<vmem>>, vector<128x512xbf16>
    %cst_22 = arith.constant dense<0.000000e+00> : vector<16x512xf32>
    %42 = tpu.matmul %40, %41, %cst_22 {dimension_numbers = #tpu.dot_dimension_numbers<[1], [0], [0], [1], [0, 0, 1, 1], [], []>} : vector<16x128xbf16>, vector<128x512xbf16>, vector<16x512xf32> -> vector<16x512xf32>
    %43 = arith.addf %39, %42 : vector<16x512xf32>
    %44 = vector.extract_strided_slice %43 {offsets = [0, 0], sizes = [16, 384], strides = [1, 1]} : vector<16x512xf32> to vector<16x384xf32>
    %45 = arith.negf %44 : vector<16x384xf32>
    %46 = math.exp %45 : vector<16x384xf32>
    %cst_23 = arith.constant 1.000000e+00 : f32
    %47 = vector.broadcast %cst_23 : f32 to vector<16x384xf32>
    %48 = arith.addf %47, %46 : vector<16x384xf32>
    %49 = arith.divf %47, %48 : vector<16x384xf32>
    %50 = vector.extract_strided_slice %49 {offsets = [0, 0], sizes = [16, 128], strides = [1, 1]} : vector<16x384xf32> to vector<16x128xf32>
    %51 = vector.extract_strided_slice %49 {offsets = [0, 128], sizes = [16, 128], strides = [1, 1]} : vector<16x384xf32> to vector<16x128xf32>
    %52 = vector.extract_strided_slice %49 {offsets = [0, 256], sizes = [16, 128], strides = [1, 1]} : vector<16x384xf32> to vector<16x128xf32>
    %53 = vector.extract_strided_slice %43 {offsets = [0, 384], sizes = [16, 128], strides = [1, 1]} : vector<16x512xf32> to vector<16x128xf32>
    %54 = math.tanh %53 : vector<16x128xf32>
    %55 = arith.mulf %51, %33 : vector<16x128xf32>
    %56 = arith.mulf %50, %54 : vector<16x128xf32>
    %57 = arith.addf %55, %56 : vector<16x128xf32>
    %58 = math.tanh %57 : vector<16x128xf32>
    %59 = arith.mulf %52, %58 : vector<16x128xf32>
    %c2_i32 = arith.constant 2 : i32
    %c16_i32_24 = arith.constant 16 : i32
    %60 = arith.muli %c2_i32, %c16_i32_24 : i32
    %61 = tpu.assume_multiple %60, 16 : i32
    %62 = arith.index_cast %61 : i32 to index
    %c0_25 = arith.constant 0 : index
    %63 = vector.load %arg8[%62, %c0_25] : memref<128x512xf32, #tpu.memory_space<vmem>>, vector<16x512xf32>
    %64 = arith.truncf %59 : vector<16x128xf32> to vector<16x128xbf16>
    %c0_26 = arith.constant 0 : index
    %c0_27 = arith.constant 0 : index
    %65 = vector.load %arg12[%c0_26, %c0_27] : memref<128x512xbf16, #tpu.memory_space<vmem>>, vector<128x512xbf16>
    %cst_28 = arith.constant dense<0.000000e+00> : vector<16x512xf32>
    %66 = tpu.matmul %64, %65, %cst_28 {dimension_numbers = #tpu.dot_dimension_numbers<[1], [0], [0], [1], [0, 0, 1, 1], [], []>} : vector<16x128xbf16>, vector<128x512xbf16>, vector<16x512xf32> -> vector<16x512xf32>
    %67 = arith.addf %63, %66 : vector<16x512xf32>
    %68 = vector.extract_strided_slice %67 {offsets = [0, 0], sizes = [16, 384], strides = [1, 1]} : vector<16x512xf32> to vector<16x384xf32>
    %69 = arith.negf %68 : vector<16x384xf32>
    %70 = math.exp %69 : vector<16x384xf32>
    %cst_29 = arith.constant 1.000000e+00 : f32
    %71 = vector.broadcast %cst_29 : f32 to vector<16x384xf32>
    %72 = arith.addf %71, %70 : vector<16x384xf32>
    %73 = arith.divf %71, %72 : vector<16x384xf32>
    %74 = vector.extract_strided_slice %73 {offsets = [0, 0], sizes = [16, 128], strides = [1, 1]} : vector<16x384xf32> to vector<16x128xf32>
    %75 = vector.extract_strided_slice %73 {offsets = [0, 128], sizes = [16, 128], strides = [1, 1]} : vector<16x384xf32> to vector<16x128xf32>
    %76 = vector.extract_strided_slice %73 {offsets = [0, 256], sizes = [16, 128], strides = [1, 1]} : vector<16x384xf32> to vector<16x128xf32>
    %77 = vector.extract_strided_slice %67 {offsets = [0, 384], sizes = [16, 128], strides = [1, 1]} : vector<16x512xf32> to vector<16x128xf32>
    %78 = math.tanh %77 : vector<16x128xf32>
    %79 = arith.mulf %75, %57 : vector<16x128xf32>
    %80 = arith.mulf %74, %78 : vector<16x128xf32>
    %81 = arith.addf %79, %80 : vector<16x128xf32>
    %82 = math.tanh %81 : vector<16x128xf32>
    %83 = arith.mulf %76, %82 : vector<16x128xf32>
    %c3_i32 = arith.constant 3 : i32
    %c16_i32_30 = arith.constant 16 : i32
    %84 = arith.muli %c3_i32, %c16_i32_30 : i32
    %85 = tpu.assume_multiple %84, 16 : i32
    %86 = arith.index_cast %85 : i32 to index
    %c0_31 = arith.constant 0 : index
    %87 = vector.load %arg8[%86, %c0_31] : memref<128x512xf32, #tpu.memory_space<vmem>>, vector<16x512xf32>
    %88 = arith.truncf %83 : vector<16x128xf32> to vector<16x128xbf16>
    %c0_32 = arith.constant 0 : index
    %c0_33 = arith.constant 0 : index
    %89 = vector.load %arg12[%c0_32, %c0_33] : memref<128x512xbf16, #tpu.memory_space<vmem>>, vector<128x512xbf16>
    %cst_34 = arith.constant dense<0.000000e+00> : vector<16x512xf32>
    %90 = tpu.matmul %88, %89, %cst_34 {dimension_numbers = #tpu.dot_dimension_numbers<[1], [0], [0], [1], [0, 0, 1, 1], [], []>} : vector<16x128xbf16>, vector<128x512xbf16>, vector<16x512xf32> -> vector<16x512xf32>
    %91 = arith.addf %87, %90 : vector<16x512xf32>
    %92 = vector.extract_strided_slice %91 {offsets = [0, 0], sizes = [16, 384], strides = [1, 1]} : vector<16x512xf32> to vector<16x384xf32>
    %93 = arith.negf %92 : vector<16x384xf32>
    %94 = math.exp %93 : vector<16x384xf32>
    %cst_35 = arith.constant 1.000000e+00 : f32
    %95 = vector.broadcast %cst_35 : f32 to vector<16x384xf32>
    %96 = arith.addf %95, %94 : vector<16x384xf32>
    %97 = arith.divf %95, %96 : vector<16x384xf32>
    %98 = vector.extract_strided_slice %97 {offsets = [0, 0], sizes = [16, 128], strides = [1, 1]} : vector<16x384xf32> to vector<16x128xf32>
    %99 = vector.extract_strided_slice %97 {offsets = [0, 128], sizes = [16, 128], strides = [1, 1]} : vector<16x384xf32> to vector<16x128xf32>
    %100 = vector.extract_strided_slice %97 {offsets = [0, 256], sizes = [16, 128], strides = [1, 1]} : vector<16x384xf32> to vector<16x128xf32>
    %101 = vector.extract_strided_slice %91 {offsets = [0, 384], sizes = [16, 128], strides = [1, 1]} : vector<16x512xf32> to vector<16x128xf32>
    %102 = math.tanh %101 : vector<16x128xf32>
    %103 = arith.mulf %99, %81 : vector<16x128xf32>
    %104 = arith.mulf %98, %102 : vector<16x128xf32>
    %105 = arith.addf %103, %104 : vector<16x128xf32>
    %106 = math.tanh %105 : vector<16x128xf32>
    %107 = arith.mulf %100, %106 : vector<16x128xf32>
    %c4_i32 = arith.constant 4 : i32
    %c16_i32_36 = arith.constant 16 : i32
    %108 = arith.muli %c4_i32, %c16_i32_36 : i32
    %109 = tpu.assume_multiple %108, 16 : i32
    %110 = arith.index_cast %109 : i32 to index
    %c0_37 = arith.constant 0 : index
    %111 = vector.load %arg8[%110, %c0_37] : memref<128x512xf32, #tpu.memory_space<vmem>>, vector<16x512xf32>
    %112 = arith.truncf %107 : vector<16x128xf32> to vector<16x128xbf16>
    %c0_38 = arith.constant 0 : index
    %c0_39 = arith.constant 0 : index
    %113 = vector.load %arg12[%c0_38, %c0_39] : memref<128x512xbf16, #tpu.memory_space<vmem>>, vector<128x512xbf16>
    %cst_40 = arith.constant dense<0.000000e+00> : vector<16x512xf32>
    %114 = tpu.matmul %112, %113, %cst_40 {dimension_numbers = #tpu.dot_dimension_numbers<[1], [0], [0], [1], [0, 0, 1, 1], [], []>} : vector<16x128xbf16>, vector<128x512xbf16>, vector<16x512xf32> -> vector<16x512xf32>
    %115 = arith.addf %111, %114 : vector<16x512xf32>
    %116 = vector.extract_strided_slice %115 {offsets = [0, 0], sizes = [16, 384], strides = [1, 1]} : vector<16x512xf32> to vector<16x384xf32>
    %117 = arith.negf %116 : vector<16x384xf32>
    %118 = math.exp %117 : vector<16x384xf32>
    %cst_41 = arith.constant 1.000000e+00 : f32
    %119 = vector.broadcast %cst_41 : f32 to vector<16x384xf32>
    %120 = arith.addf %119, %118 : vector<16x384xf32>
    %121 = arith.divf %119, %120 : vector<16x384xf32>
    %122 = vector.extract_strided_slice %121 {offsets = [0, 0], sizes = [16, 128], strides = [1, 1]} : vector<16x384xf32> to vector<16x128xf32>
    %123 = vector.extract_strided_slice %121 {offsets = [0, 128], sizes = [16, 128], strides = [1, 1]} : vector<16x384xf32> to vector<16x128xf32>
    %124 = vector.extract_strided_slice %121 {offsets = [0, 256], sizes = [16, 128], strides = [1, 1]} : vector<16x384xf32> to vector<16x128xf32>
    %125 = vector.extract_strided_slice %115 {offsets = [0, 384], sizes = [16, 128], strides = [1, 1]} : vector<16x512xf32> to vector<16x128xf32>
    %126 = math.tanh %125 : vector<16x128xf32>
    %127 = arith.mulf %123, %105 : vector<16x128xf32>
    %128 = arith.mulf %122, %126 : vector<16x128xf32>
    %129 = arith.addf %127, %128 : vector<16x128xf32>
    %130 = math.tanh %129 : vector<16x128xf32>
    %131 = arith.mulf %124, %130 : vector<16x128xf32>
    %c5_i32 = arith.constant 5 : i32
    %c16_i32_42 = arith.constant 16 : i32
    %132 = arith.muli %c5_i32, %c16_i32_42 : i32
    %133 = tpu.assume_multiple %132, 16 : i32
    %134 = arith.index_cast %133 : i32 to index
    %c0_43 = arith.constant 0 : index
    %135 = vector.load %arg8[%134, %c0_43] : memref<128x512xf32, #tpu.memory_space<vmem>>, vector<16x512xf32>
    %136 = arith.truncf %131 : vector<16x128xf32> to vector<16x128xbf16>
    %c0_44 = arith.constant 0 : index
    %c0_45 = arith.constant 0 : index
    %137 = vector.load %arg12[%c0_44, %c0_45] : memref<128x512xbf16, #tpu.memory_space<vmem>>, vector<128x512xbf16>
    %cst_46 = arith.constant dense<0.000000e+00> : vector<16x512xf32>
    %138 = tpu.matmul %136, %137, %cst_46 {dimension_numbers = #tpu.dot_dimension_numbers<[1], [0], [0], [1], [0, 0, 1, 1], [], []>} : vector<16x128xbf16>, vector<128x512xbf16>, vector<16x512xf32> -> vector<16x512xf32>
    %139 = arith.addf %135, %138 : vector<16x512xf32>
    %140 = vector.extract_strided_slice %139 {offsets = [0, 0], sizes = [16, 384], strides = [1, 1]} : vector<16x512xf32> to vector<16x384xf32>
    %141 = arith.negf %140 : vector<16x384xf32>
    %142 = math.exp %141 : vector<16x384xf32>
    %cst_47 = arith.constant 1.000000e+00 : f32
    %143 = vector.broadcast %cst_47 : f32 to vector<16x384xf32>
    %144 = arith.addf %143, %142 : vector<16x384xf32>
    %145 = arith.divf %143, %144 : vector<16x384xf32>
    %146 = vector.extract_strided_slice %145 {offsets = [0, 0], sizes = [16, 128], strides = [1, 1]} : vector<16x384xf32> to vector<16x128xf32>
    %147 = vector.extract_strided_slice %145 {offsets = [0, 128], sizes = [16, 128], strides = [1, 1]} : vector<16x384xf32> to vector<16x128xf32>
    %148 = vector.extract_strided_slice %145 {offsets = [0, 256], sizes = [16, 128], strides = [1, 1]} : vector<16x384xf32> to vector<16x128xf32>
    %149 = vector.extract_strided_slice %139 {offsets = [0, 384], sizes = [16, 128], strides = [1, 1]} : vector<16x512xf32> to vector<16x128xf32>
    %150 = math.tanh %149 : vector<16x128xf32>
    %151 = arith.mulf %147, %129 : vector<16x128xf32>
    %152 = arith.mulf %146, %150 : vector<16x128xf32>
    %153 = arith.addf %151, %152 : vector<16x128xf32>
    %154 = math.tanh %153 : vector<16x128xf32>
    %155 = arith.mulf %148, %154 : vector<16x128xf32>
    %c6_i32 = arith.constant 6 : i32
    %c16_i32_48 = arith.constant 16 : i32
    %156 = arith.muli %c6_i32, %c16_i32_48 : i32
    %157 = tpu.assume_multiple %156, 16 : i32
    %158 = arith.index_cast %157 : i32 to index
    %c0_49 = arith.constant 0 : index
    %159 = vector.load %arg8[%158, %c0_49] : memref<128x512xf32, #tpu.memory_space<vmem>>, vector<16x512xf32>
    %160 = arith.truncf %155 : vector<16x128xf32> to vector<16x128xbf16>
    %c0_50 = arith.constant 0 : index
    %c0_51 = arith.constant 0 : index
    %161 = vector.load %arg12[%c0_50, %c0_51] : memref<128x512xbf16, #tpu.memory_space<vmem>>, vector<128x512xbf16>
    %cst_52 = arith.constant dense<0.000000e+00> : vector<16x512xf32>
    %162 = tpu.matmul %160, %161, %cst_52 {dimension_numbers = #tpu.dot_dimension_numbers<[1], [0], [0], [1], [0, 0, 1, 1], [], []>} : vector<16x128xbf16>, vector<128x512xbf16>, vector<16x512xf32> -> vector<16x512xf32>
    %163 = arith.addf %159, %162 : vector<16x512xf32>
    %164 = vector.extract_strided_slice %163 {offsets = [0, 0], sizes = [16, 384], strides = [1, 1]} : vector<16x512xf32> to vector<16x384xf32>
    %165 = arith.negf %164 : vector<16x384xf32>
    %166 = math.exp %165 : vector<16x384xf32>
    %cst_53 = arith.constant 1.000000e+00 : f32
    %167 = vector.broadcast %cst_53 : f32 to vector<16x384xf32>
    %168 = arith.addf %167, %166 : vector<16x384xf32>
    %169 = arith.divf %167, %168 : vector<16x384xf32>
    %170 = vector.extract_strided_slice %169 {offsets = [0, 0], sizes = [16, 128], strides = [1, 1]} : vector<16x384xf32> to vector<16x128xf32>
    %171 = vector.extract_strided_slice %169 {offsets = [0, 128], sizes = [16, 128], strides = [1, 1]} : vector<16x384xf32> to vector<16x128xf32>
    %172 = vector.extract_strided_slice %169 {offsets = [0, 256], sizes = [16, 128], strides = [1, 1]} : vector<16x384xf32> to vector<16x128xf32>
    %173 = vector.extract_strided_slice %163 {offsets = [0, 384], sizes = [16, 128], strides = [1, 1]} : vector<16x512xf32> to vector<16x128xf32>
    %174 = math.tanh %173 : vector<16x128xf32>
    %175 = arith.mulf %171, %153 : vector<16x128xf32>
    %176 = arith.mulf %170, %174 : vector<16x128xf32>
    %177 = arith.addf %175, %176 : vector<16x128xf32>
    %178 = math.tanh %177 : vector<16x128xf32>
    %179 = arith.mulf %172, %178 : vector<16x128xf32>
    %c7_i32 = arith.constant 7 : i32
    %c16_i32_54 = arith.constant 16 : i32
    %180 = arith.muli %c7_i32, %c16_i32_54 : i32
    %181 = tpu.assume_multiple %180, 16 : i32
    %182 = arith.index_cast %181 : i32 to index
    %c0_55 = arith.constant 0 : index
    %183 = vector.load %arg8[%182, %c0_55] : memref<128x512xf32, #tpu.memory_space<vmem>>, vector<16x512xf32>
    %184 = arith.truncf %179 : vector<16x128xf32> to vector<16x128xbf16>
    %c0_56 = arith.constant 0 : index
    %c0_57 = arith.constant 0 : index
    %185 = vector.load %arg12[%c0_56, %c0_57] : memref<128x512xbf16, #tpu.memory_space<vmem>>, vector<128x512xbf16>
    %cst_58 = arith.constant dense<0.000000e+00> : vector<16x512xf32>
    %186 = tpu.matmul %184, %185, %cst_58 {dimension_numbers = #tpu.dot_dimension_numbers<[1], [0], [0], [1], [0, 0, 1, 1], [], []>} : vector<16x128xbf16>, vector<128x512xbf16>, vector<16x512xf32> -> vector<16x512xf32>
    %187 = arith.addf %183, %186 : vector<16x512xf32>
    %188 = vector.extract_strided_slice %187 {offsets = [0, 0], sizes = [16, 384], strides = [1, 1]} : vector<16x512xf32> to vector<16x384xf32>
    %189 = arith.negf %188 : vector<16x384xf32>
    %190 = math.exp %189 : vector<16x384xf32>
    %cst_59 = arith.constant 1.000000e+00 : f32
    %191 = vector.broadcast %cst_59 : f32 to vector<16x384xf32>
    %192 = arith.addf %191, %190 : vector<16x384xf32>
    %193 = arith.divf %191, %192 : vector<16x384xf32>
    %194 = vector.extract_strided_slice %193 {offsets = [0, 0], sizes = [16, 128], strides = [1, 1]} : vector<16x384xf32> to vector<16x128xf32>
    %195 = vector.extract_strided_slice %193 {offsets = [0, 128], sizes = [16, 128], strides = [1, 1]} : vector<16x384xf32> to vector<16x128xf32>
    %196 = vector.extract_strided_slice %193 {offsets = [0, 256], sizes = [16, 128], strides = [1, 1]} : vector<16x384xf32> to vector<16x128xf32>
    %197 = vector.extract_strided_slice %187 {offsets = [0, 384], sizes = [16, 128], strides = [1, 1]} : vector<16x512xf32> to vector<16x128xf32>
    %198 = math.tanh %197 : vector<16x128xf32>
    %199 = arith.mulf %195, %177 : vector<16x128xf32>
    %200 = arith.mulf %194, %198 : vector<16x128xf32>
    %201 = arith.addf %199, %200 : vector<16x128xf32>
    %202 = math.tanh %201 : vector<16x128xf32>
    %203 = arith.mulf %196, %202 : vector<16x128xf32>
    %c8_i32 = arith.constant 8 : i32
    %c0_60 = arith.constant 0 : index
    %c0_61 = arith.constant 0 : index
    %204 = vector.load %arg9[%c0_60, %c0_61] : memref<16x128xf32, #tpu.memory_space<vmem>>, vector<16x128xf32>
    tpu.vector_store %arg9[%c0_60, %c0_61], %203 {strides = array<i32>} : memref<16x128xf32, #tpu.memory_space<vmem>>, vector<16x128xf32>,
    %c0_62 = arith.constant 0 : index
    %c0_63 = arith.constant 0 : index
    %205 = vector.load %arg10[%c0_62, %c0_63] : memref<16x128xf32, #tpu.memory_space<vmem>>, vector<16x128xf32>
    tpu.vector_store %arg10[%c0_62, %c0_63], %201 {strides = array<i32>} : memref<16x128xf32, #tpu.memory_space<vmem>>, vector<16x128xf32>,
    %c0_i32_64 = arith.constant 0 : i32
    %206 = arith.cmpi eq, %arg0, %c0_i32_64 : i32
    %207 = arith.extui %206 : i1 to i32
    %c0_i32_65 = arith.constant 0 : i32
    %208 = arith.cmpi ne, %207, %c0_i32_65 : i32
    scf.if %208 {
      %c0_66 = arith.constant 0 : index
      %c0_67 = arith.constant 0 : index
      %209 = vector.load %arg5[%c0_66, %c0_67] : memref<128x4xf32, #tpu.memory_space<vmem>>, vector<128x4xf32>
      %cst_68 = arith.constant dense<0.000000e+00> : vector<16x4xf32>
      %210 = tpu.matmul %203, %209, %cst_68 {dimension_numbers = #tpu.dot_dimension_numbers<[1], [0], [0], [1], [0, 0, 1, 1], [], []>} : vector<16x128xf32>, vector<128x4xf32>, vector<16x4xf32> -> vector<16x4xf32>
      %c0_69 = arith.constant 0 : index
      %c0_70 = arith.constant 0 : index
      %211 = vector.load %arg6[%c0_69, %c0_70] : memref<1x4xf32, #tpu.memory_space<vmem>>, vector<1x4xf32>
      %212 = vector.broadcast %211 : vector<1x4xf32> to vector<16x4xf32>
      %213 = arith.addf %210, %212 : vector<16x4xf32>
      %214 = arith.negf %213 : vector<16x4xf32>
      %215 = math.exp %214 : vector<16x4xf32>
      %cst_71 = arith.constant 1.000000e+00 : f32
      %216 = vector.broadcast %cst_71 : f32 to vector<16x4xf32>
      %217 = arith.addf %216, %215 : vector<16x4xf32>
      %218 = arith.divf %216, %217 : vector<16x4xf32>
      %c0_72 = arith.constant 0 : index
      %c0_73 = arith.constant 0 : index
      %219 = vector.load %arg7[%c0_72, %c0_73] : memref<16x4xf32, #tpu.memory_space<vmem>>, vector<16x4xf32>
      tpu.vector_store %arg7[%c0_72, %c0_73], %218 {strides = array<i32>} : memref<16x4xf32, #tpu.memory_space<vmem>>, vector<16x4xf32>,
    } else {
    }
    return
  }
  func.func @transform_0(%arg0: i32) -> (i32, i32) {
    %c0_i32 = arith.constant 0 : i32
    %c0_i32_0 = arith.constant 0 : i32
    return %arg0, %c0_i32 : i32, i32
  }
  func.func @transform_3(%arg0: i32) -> (i32, i32) {
    %c0_i32 = arith.constant 0 : i32
    %c0_i32_0 = arith.constant 0 : i32
    %c0_i32_1 = arith.constant 0 : i32
    return %c0_i32, %c0_i32_0 : i32, i32
  }
  func.func @transform_4(%arg0: i32) -> (i32, i32) {
    %c0_i32 = arith.constant 0 : i32
    %c0_i32_0 = arith.constant 0 : i32
    %c0_i32_1 = arith.constant 0 : i32
    return %c0_i32, %c0_i32_0 : i32, i32
  }
  func.func @transform_5(%arg0: i32) -> (i32, i32) {
    %c0_i32 = arith.constant 0 : i32
    %c0_i32_0 = arith.constant 0 : i32
    %c0_i32_1 = arith.constant 0 : i32
    return %c0_i32, %c0_i32_0 : i32, i32
  }
  func.func @transform_6(%arg0: i32) -> (i32, i32) {
    %c0_i32 = arith.constant 0 : i32
    %c0_i32_0 = arith.constant 0 : i32
    %c0_i32_1 = arith.constant 0 : i32
    return %c0_i32, %c0_i32_0 : i32, i32
  }
}

</mosaic_0001>

<llo_original>
// kernel: candle_lstm_forward.1
$region0: #{candle_lstm_forward.1}
  #allocation0 [shape = 'u32[]', space=smem, size = 0x4, offset = 0x4, fixed_abs, tag = 'smem constant byte address 0x4 - core index']
  #allocation1 [shape = 'u32[144,128]{1,0:T(1,128)}', space=vmem, size = 0x12000, scoped, tag = 'internal scratch']
  #allocation2 [shape = 'f32[128,512]{1,0:T(8,128)}', space=vmem, size = 0x40000, scoped, tag = 'scratch operand']
  #allocation3 [shape = 'f32[16,128]{1,0:T(8,128)}', space=vmem, size = 0x2000, scoped, tag = 'scratch operand']
  #allocation4 [shape = 'f32[16,128]{1,0:T(8,128)}', space=vmem, size = 0x2000, scoped, tag = 'scratch operand']
  #allocation5 [shape = 'bf16[16,512]{1,0:T(8,128)(2,1)}', space=vmem, size = 0x4000, scoped, tag = 'scratch operand']
  #allocation6 [shape = 'bf16[128,512]{1,0:T(8,128)(2,1)}', space=vmem, size = 0x20000, scoped, tag = 'scratch operand']
  #allocation7 [shape = 's32[2]{0}', space=sflag, size = 0x8, scoped, tag = 'scratch operand']
  #allocation8 [shape = 's32[]', space=sflag, size = 0x4, offset = 0, fixed_abs, tag = 'sflag constant byte address 0x0 - dummy sync flag']
  #allocation9 [shape = 's32[]', space=sflag, size = 0x4, offset = 0, fixed_abs, tag = 'sflag constant byte address 0x0 - dummy sync flag']
  %s0 = inlined_call_operand.vmem [shape: bf16[128,16], index: 0, kind: input, shape index: {}]
  %s1 = inlined_call_operand.vmem [shape: bf16[16,512], index: 1, kind: input, shape index: {}]
  %s2 = inlined_call_operand.vmem [shape: bf16[128,512], index: 2, kind: input, shape index: {}]
  %s3 = inlined_call_operand.vmem [shape: f32[1,512], index: 3, kind: input, shape index: {}]
  %s4 = inlined_call_operand.vmem [shape: f32[128,4], index: 4, kind: input, shape index: {}]
  %s5 = inlined_call_operand.vmem [shape: f32[1,4], index: 5, kind: input, shape index: {}]
  %s6 = inlined_call_operand.vmem [shape: f32[16,4], index: 6, kind: output, shape index: {}]
  %s7 = sld [smem:[#allocation0]]
  $region102: #{candle_lstm_forward.1} parent=0
    _
  %s9 = ssub.s32 1, %s7
  %s10 = scalar_select 0, %s9, %s7
  // Predicated region
  $region2: #{candle_lstm_forward.1} parent=0 // pred_check
    _
  $region3: #{candle_lstm_forward.1} parent=0 // pred_check_branch
    %12 = sbr.rel (0) target = $region5
  $region4: #{candle_lstm_forward.1} parent=0 // pred_region
    _
  $region5: #{candle_lstm_forward.1} parent=0 // pred_fallthru
    _
  // Predicated region
  $region6: #{candle_lstm_forward.1} parent=0 // pred_check
    _
  $region7: #{candle_lstm_forward.1} parent=0 // pred_check_branch
    %14 = sbr.rel (0) target = $region9
  $region8: #{candle_lstm_forward.1} parent=0 // pred_region
    _
  $region9: #{candle_lstm_forward.1} parent=0 // pred_fallthru
    _
  // Predicated region
  $region10: #{candle_lstm_forward.1} parent=0 // pred_check
    _
  $region11: #{candle_lstm_forward.1} parent=0 // pred_check_branch
    %16 = sbr.rel (0) target = $region13
  $region12: #{candle_lstm_forward.1} parent=0 // pred_region
    _
  $region13: #{candle_lstm_forward.1} parent=0 // pred_fallthru
    _
  // Predicated region
  $region14: #{candle_lstm_forward.1} parent=0 // pred_check
    _
  $region15: #{candle_lstm_forward.1} parent=0 // pred_check_branch
    %18 = sbr.rel (0) target = $region17
  $region16: #{candle_lstm_forward.1} parent=0 // pred_region
    _
  $region17: #{candle_lstm_forward.1} parent=0 // pred_fallthru
    _
  %p20 = scmp.eq.s32.totalorder 0, 0
  // Predicated region
  $region18: #{candle_lstm_forward.1} parent=0 // pred_check
    %p21 = pneg %p20
  $region19: #{candle_lstm_forward.1} parent=0 // pred_check_branch
    %23 = sbr.rel (%p21) target = $region21
  $region20: #{candle_lstm_forward.1} parent=0 // pred_region
    %24 = vst [vmem:[#allocation3] sm:$0xff] 0.0
    %25 = vst [vmem:[#allocation3 + $0x8] sm:$0xff] 0.0
    %26 = vst [vmem:[#allocation4] sm:$0xff] 0.0
    %27 = vst [vmem:[#allocation4 + $0x8] sm:$0xff] 0.0
    %p29 = scmp.lt.u32.totalorder 32, 8
    %p30 = pneg %p29
    // Predicated region
    $region22: #{candle_lstm_forward.1} parent=20 // pred_check
      _
    $region23: #{candle_lstm_forward.1} parent=20 // pred_check_branch
      %32 = sbr.rel (%p29) target = $region25
    $region24: #{candle_lstm_forward.1} parent=20 // pred_region
      %s48 = sand.u32 32, 7
      %p49 = scmp.eq.s32.totalorder %s48, 0
      // Predicated region
      $region37: #{candle_lstm_forward.1} parent=24 // pred_check
        %p50 = pneg %p49
      $region38: #{candle_lstm_forward.1} parent=24 // pred_check_branch
        %52 = sbr.rel (%p50) target = $region40
      $region39: #{candle_lstm_forward.1} parent=24 // pred_region
        loop: start=0, step=1, limit=1
        $region41: #{candle_lstm_forward.1} parent=39 // loop_pre_header
          _
        $region42: #{candle_lstm_forward.1} parent=39 // loop_header
          %s54 = sphi 0, %s58
          %p55 = scmp.ge.s32.totalorder %s54, 1
          %s59 = sphi %s1, %s1
          %s60 = sphi [#allocation5], [#allocation5]
        $region43: #{candle_lstm_forward.1} parent=39 // loop_header_branch
          %57 = sbr.rel (%p55) target = $region47
        $region44: #{candle_lstm_forward.1} parent=39 // loop_body
          %v61 = vld [vmem:[%s59] sm:$0xff]
          %62 = vst [vmem:[%s60] sm:$0xff] %v61
          %v63 = vld [vmem:[%s59 + $0x8] sm:$0xff]
          %64 = vst [vmem:[%s60 + $0x8] sm:$0xff] %v63
          %v65 = vld [vmem:[%s59 + $0x10] sm:$0xff]
          %66 = vst [vmem:[%s60 + $0x10] sm:$0xff] %v65
          %v67 = vld [vmem:[%s59 + $0x18] sm:$0xff]
          %68 = vst [vmem:[%s60 + $0x18] sm:$0xff] %v67
        $region45: #{candle_lstm_forward.1} parent=39 // loop_footer
          %s58 = sadd.s32 1, %s54
        $region46: #{candle_lstm_forward.1} parent=39 // loop_footer_branch
          %53 = sbr.rel target = $region42
        $region47: #{candle_lstm_forward.1} parent=39 // loop_exit
          _
      $region40: #{candle_lstm_forward.1} parent=24 // pred_fallthru
        _
      %p69 = pneg %p49
      // Predicated region
      $region48: #{candle_lstm_forward.1} parent=24 // pred_check
        _
      $region49: #{candle_lstm_forward.1} parent=24 // pred_check_branch
        %71 = sbr.rel (%p49) target = $region51
      $region50: #{candle_lstm_forward.1} parent=24 // pred_region
        %s72 = sand.u32 32, 7
      $region51: #{candle_lstm_forward.1} parent=24 // pred_fallthru
        _
    $region25: #{candle_lstm_forward.1} parent=20 // pred_fallthru
      _
    // Predicated region
    $region26: #{candle_lstm_forward.1} parent=20 // pred_check
      %p33 = pneg %p29
    $region27: #{candle_lstm_forward.1} parent=20 // pred_check_branch
      %35 = sbr.rel (%p33) target = $region29
    $region28: #{candle_lstm_forward.1} parent=20 // pred_region
      %s36 = sshll.u32 1, 32
      %s37 = ssub.s32 %s36, 1
      loop: start=0, step=1, limit=1
      $region30: #{candle_lstm_forward.1} parent=28 // loop_pre_header
        _
      $region31: #{candle_lstm_forward.1} parent=28 // loop_header
        %s39 = sphi 0, %s43
        %p40 = scmp.ge.s32.totalorder %s39, 1
        %s44 = sphi %s1, %s1
        %s45 = sphi [#allocation5], [#allocation5]
      $region32: #{candle_lstm_forward.1} parent=28 // loop_header_branch
        %42 = sbr.rel (%p40) target = $region36
      $region33: #{candle_lstm_forward.1} parent=28 // loop_body
        %v46 = vld [vmem:[%s44] sm:%s37]
        %47 = vst [vmem:[%s45] sm:%s37] %v46
      $region34: #{candle_lstm_forward.1} parent=28 // loop_footer
        %s43 = sadd.s32 1, %s39
      $region35: #{candle_lstm_forward.1} parent=28 // loop_footer_branch
        %38 = sbr.rel target = $region31
      $region36: #{candle_lstm_forward.1} parent=28 // loop_exit
        _
    $region29: #{candle_lstm_forward.1} parent=20 // pred_fallthru
      _
    // Predicated region
    $region52: #{candle_lstm_forward.1} parent=20 // pred_check
      _
    $region53: #{candle_lstm_forward.1} parent=20 // pred_check_branch
      %75 = sbr.rel (0) target = $region55
    $region54: #{candle_lstm_forward.1} parent=20 // pred_region
      %76 = vsyncadd [#allocation7], 512
    $region55: #{candle_lstm_forward.1} parent=20 // pred_fallthru
      _
    %s77 = scalar_lea.sflag [#allocation7], 1
    %p79 = scmp.lt.u32.totalorder 256, 8
    %p80 = pneg %p79
    // Predicated region
    $region56: #{candle_lstm_forward.1} parent=20 // pred_check
      _
    $region57: #{candle_lstm_forward.1} parent=20 // pred_check_branch
      %82 = sbr.rel (%p79) target = $region59
    $region58: #{candle_lstm_forward.1} parent=20 // pred_region
      %s98 = sand.u32 256, 7
      %p99 = scmp.eq.s32.totalorder %s98, 0
      // Predicated region
      $region71: #{candle_lstm_forward.1} parent=58 // pred_check
        %p100 = pneg %p99
      $region72: #{candle_lstm_forward.1} parent=58 // pred_check_branch
        %102 = sbr.rel (%p100) target = $region74
      $region73: #{candle_lstm_forward.1} parent=58 // pred_region
        loop: start=0, step=1, limit=1
        $region75: #{candle_lstm_forward.1} parent=73 // loop_pre_header
          _
        $region76: #{candle_lstm_forward.1} parent=73 // loop_header
          %s104 = sphi 0, %s108
          %p105 = scmp.ge.s32.totalorder %s104, 1
          %s109 = sphi %s2, %s2
          %s110 = sphi [#allocation6], [#allocation6]
        $region77: #{candle_lstm_forward.1} parent=73 // loop_header_branch
          %107 = sbr.rel (%p105) target = $region81
        $region78: #{candle_lstm_forward.1} parent=73 // loop_body
          %v111 = vld [vmem:[%s109] sm:$0xff]
          %112 = vst [vmem:[%s110] sm:$0xff] %v111
          %v113 = vld [vmem:[%s109 + $0x8] sm:$0xff]
          %114 = vst [vmem:[%s110 + $0x8] sm:$0xff] %v113
          %v115 = vld [vmem:[%s109 + $0x10] sm:$0xff]
          %116 = vst [vmem:[%s110 + $0x10] sm:$0xff] %v115
          %v117 = vld [vmem:[%s109 + $0x18] sm:$0xff]
          %118 = vst [vmem:[%s110 + $0x18] sm:$0xff] %v117
          %v119 = vld [vmem:[%s109 + $0x20] sm:$0xff]
          %120 = vst [vmem:[%s110 + $0x20] sm:$0xff] %v119
          %v121 = vld [vmem:[%s109 + $0x28] sm:$0xff]
          %122 = vst [vmem:[%s110 + $0x28] sm:$0xff] %v121
          %v123 = vld [vmem:[%s109 + $0x30] sm:$0xff]
          %124 = vst [vmem:[%s110 + $0x30] sm:$0xff] %v123
          %v125 = vld [vmem:[%s109 + $0x38] sm:$0xff]
          %126 = vst [vmem:[%s110 + $0x38] sm:$0xff] %v125
          %v127 = vld [vmem:[%s109 + $0x40] sm:$0xff]
          %128 = vst [vmem:[%s110 + $0x40] sm:$0xff] %v127
          %v129 = vld [vmem:[%s109 + $0x48] sm:$0xff]
          %130 = vst [vmem:[%s110 + $0x48] sm:$0xff] %v129
          %v131 = vld [vmem:[%s109 + $0x50] sm:$0xff]
          %132 = vst [vmem:[%s110 + $0x50] sm:$0xff] %v131
          %v133 = vld [vmem:[%s109 + $0x58] sm:$0xff]
          %134 = vst [vmem:[%s110 + $0x58] sm:$0xff] %v133
          %v135 = vld [vmem:[%s109 + $0x60] sm:$0xff]
          %136 = vst [vmem:[%s110 + $0x60] sm:$0xff] %v135
          %v137 = vld [vmem:[%s109 + $0x68] sm:$0xff]
          %138 = vst [vmem:[%s110 + $0x68] sm:$0xff] %v137
          %v139 = vld [vmem:[%s109 + $0x70] sm:$0xff]
          %140 = vst [vmem:[%s110 + $0x70] sm:$0xff] %v139
          %v141 = vld [vmem:[%s109 + $0x78] sm:$0xff]
          %142 = vst [vmem:[%s110 + $0x78] sm:$0xff] %v141
          %v143 = vld [vmem:[%s109 + $0x80] sm:$0xff]
          %144 = vst [vmem:[%s110 + $0x80] sm:$0xff] %v143
          %v145 = vld [vmem:[%s109 + $0x88] sm:$0xff]
          %146 = vst [vmem:[%s110 + $0x88] sm:$0xff] %v145
          %v147 = vld [vmem:[%s109 + $0x90] sm:$0xff]
          %148 = vst [vmem:[%s110 + $0x90] sm:$0xff] %v147
          %v149 = vld [vmem:[%s109 + $0x98] sm:$0xff]
          %150 = vst [vmem:[%s110 + $0x98] sm:$0xff] %v149
          %v151 = vld [vmem:[%s109 + $0xa0] sm:$0xff]
          %152 = vst [vmem:[%s110 + $0xa0] sm:$0xff] %v151
          %v153 = vld [vmem:[%s109 + $0xa8] sm:$0xff]
          %154 = vst [vmem:[%s110 + $0xa8] sm:$0xff] %v153
          %v155 = vld [vmem:[%s109 + $0xb0] sm:$0xff]
          %156 = vst [vmem:[%s110 + $0xb0] sm:$0xff] %v155
          %v157 = vld [vmem:[%s109 + $0xb8] sm:$0xff]
          %158 = vst [vmem:[%s110 + $0xb8] sm:$0xff] %v157
          %v159 = vld [vmem:[%s109 + $0xc0] sm:$0xff]
          %160 = vst [vmem:[%s110 + $0xc0] sm:$0xff] %v159
          %v161 = vld [vmem:[%s109 + $0xc8] sm:$0xff]
          %162 = vst [vmem:[%s110 + $0xc8] sm:$0xff] %v161
          %v163 = vld [vmem:[%s109 + $0xd0] sm:$0xff]
          %164 = vst [vmem:[%s110 + $0xd0] sm:$0xff] %v163
          %v165 = vld [vmem:[%s109 + $0xd8] sm:$0xff]
          %166 = vst [vmem:[%s110 + $0xd8] sm:$0xff] %v165
          %v167 = vld [vmem:[%s109 + $0xe0] sm:$0xff]
          %168 = vst [vmem:[%s110 + $0xe0] sm:$0xff] %v167
          %v169 = vld [vmem:[%s109 + $0xe8] sm:$0xff]
          %170 = vst [vmem:[%s110 + $0xe8] sm:$0xff] %v169
          %v171 = vld [vmem:[%s109 + $0xf0] sm:$0xff]
          %172 = vst [vmem:[%s110 + $0xf0] sm:$0xff] %v171
          %v173 = vld [vmem:[%s109 + $0xf8] sm:$0xff]
          %174 = vst [vmem:[%s110 + $0xf8] sm:$0xff] %v173
        $region79: #{candle_lstm_forward.1} parent=73 // loop_footer
          %s108 = sadd.s32 1, %s104
        $region80: #{candle_lstm_forward.1} parent=73 // loop_footer_branch
          %103 = sbr.rel target = $region76
        $region81: #{candle_lstm_forward.1} parent=73 // loop_exit
          _
      $region74: #{candle_lstm_forward.1} parent=58 // pred_fallthru
        _
      %p175 = pneg %p99
      // Predicated region
      $region82: #{candle_lstm_forward.1} parent=58 // pred_check
        _
      $region83: #{candle_lstm_forward.1} parent=58 // pred_check_branch
        %177 = sbr.rel (%p99) target = $region85
      $region84: #{candle_lstm_forward.1} parent=58 // pred_region
        %s178 = sand.u32 256, 7
      $region85: #{candle_lstm_forward.1} parent=58 // pred_fallthru
        _
    $region59: #{candle_lstm_forward.1} parent=20 // pred_fallthru
      _
    // Predicated region
    $region60: #{candle_lstm_forward.1} parent=20 // pred_check
      %p83 = pneg %p79
    $region61: #{candle_lstm_forward.1} parent=20 // pred_check_branch
      %85 = sbr.rel (%p83) target = $region63
    $region62: #{candle_lstm_forward.1} parent=20 // pred_region
      %s86 = sshll.u32 1, 256
      %s87 = ssub.s32 %s86, 1
      loop: start=0, step=1, limit=1
      $region64: #{candle_lstm_forward.1} parent=62 // loop_pre_header
        _
      $region65: #{candle_lstm_forward.1} parent=62 // loop_header
        %s89 = sphi 0, %s93
        %p90 = scmp.ge.s32.totalorder %s89, 1
        %s94 = sphi %s2, %s2
        %s95 = sphi [#allocation6], [#allocation6]
      $region66: #{candle_lstm_forward.1} parent=62 // loop_header_branch
        %92 = sbr.rel (%p90) target = $region70
      $region67: #{candle_lstm_forward.1} parent=62 // loop_body
        %v96 = vld [vmem:[%s94] sm:%s87]
        %97 = vst [vmem:[%s95] sm:%s87] %v96
      $region68: #{candle_lstm_forward.1} parent=62 // loop_footer
        %s93 = sadd.s32 1, %s89
      $region69: #{candle_lstm_forward.1} parent=62 // loop_footer_branch
        %88 = sbr.rel target = $region65
      $region70: #{candle_lstm_forward.1} parent=62 // loop_exit
        _
    $region63: #{candle_lstm_forward.1} parent=20 // pred_fallthru
      _
    // Predicated region
    $region86: #{candle_lstm_forward.1} parent=20 // pred_check
      _
    $region87: #{candle_lstm_forward.1} parent=20 // pred_check_branch
      %181 = sbr.rel (0) target = $region89
    $region88: #{candle_lstm_forward.1} parent=20 // pred_region
      %182 = vsyncadd %s77, 4096
    $region89: #{candle_lstm_forward.1} parent=20 // pred_fallthru
      _
    %s183 = smul.u32 4, 2
    %s184 = smul.u32 %s183, 4
    %s185 = sshll.u32 %s184, 4
    %186 = dma.done [#allocation7], %s185
    %s187 = smul.u32 4, 16
    %s188 = smul.u32 %s187, 4
    %s189 = sshll.u32 %s188, 4
    %190 = dma.done %s77, %s189
  $region21: #{candle_lstm_forward.1} parent=0 // pred_fallthru
    _
  %v191 = vld [vmem:[%s0] sm:$0xf]
  %v192 = vld [vmem:[%s0 + $0x4] sm:$0xf]
  %v193 = vld [vmem:[%s0 + $0x8] sm:$0xf]
  %v194 = vld [vmem:[%s0 + $0xc] sm:$0xf]
  %v195 = vld [vmem:[%s0 + $0x10] sm:$0xf]
  %v196 = vld [vmem:[%s0 + $0x14] sm:$0xf]
  %v197 = vld [vmem:[%s0 + $0x18] sm:$0xf]
  %v198 = vld [vmem:[%s0 + $0x1c] sm:$0xf]
  %v199 = vld [vmem:[%s0 + $0x20] sm:$0xf]
  %v200 = vld [vmem:[%s0 + $0x24] sm:$0xf]
  %v201 = vld [vmem:[%s0 + $0x28] sm:$0xf]
  %v202 = vld [vmem:[%s0 + $0x2c] sm:$0xf]
  %v203 = vld [vmem:[%s0 + $0x30] sm:$0xf]
  %v204 = vld [vmem:[%s0 + $0x34] sm:$0xf]
  %v205 = vld [vmem:[%s0 + $0x38] sm:$0xf]
  %v206 = vld [vmem:[%s0 + $0x3c] sm:$0xf]
  %v207 = vld [vmem:[#allocation5] sm:$0xff]
  %v208 = vld [vmem:[#allocation5 + $0x8] sm:$0xff]
  %v209 = vld [vmem:[#allocation5 + $0x10] sm:$0xff]
  %v210 = vld [vmem:[#allocation5 + $0x18] sm:$0xff]
  %v211 = vld [vmem:[%s3] sm:$0xf]
  %v213 = vlaneseq
  %v214 = vshrl.u32 %v213, 7
  %v215 = vsub.s32 0, %v214
  %v216 = vrot.slane %v211, %v215
  %v217 = vlaneseq
  %v218 = vshrl.u32 %v217, 7
  %v219 = vsub.s32 1, %v218
  %v220 = vrot.slane %v211, %v219
  %v221 = vlaneseq
  %v222 = vshrl.u32 %v221, 7
  %v223 = vsub.s32 2, %v222
  %v224 = vrot.slane %v211, %v223
  %v225 = vlaneseq
  %v226 = vshrl.u32 %v225, 7
  %v227 = vsub.s32 3, %v226
  %v228 = vrot.slane %v211, %v227
  %v249 = vunpack.c.l.b16 %v191
  %v250 = vunpack.c.l.b16 %v192
  %v251 = vunpack.c.l.b16 %v193
  %v252 = vunpack.c.l.b16 %v194
  %v253 = vunpack.c.l.b16 %v195
  %v254 = vunpack.c.l.b16 %v196
  %v255 = vunpack.c.l.b16 %v197
  %v256 = vunpack.c.l.b16 %v198
  %v257 = vunpack.c.l.b16 %v199
  %v258 = vunpack.c.l.b16 %v200
  %v259 = vunpack.c.l.b16 %v201
  %v260 = vunpack.c.l.b16 %v202
  %v261 = vunpack.c.l.b16 %v203
  %v262 = vunpack.c.l.b16 %v204
  %v263 = vunpack.c.l.b16 %v205
  %v264 = vunpack.c.l.b16 %v206
  %v265 = vpack.c.b16 %v250, %v249
  %v266 = vpack.c.b16 %v252, %v251
  %v267 = vpack.c.b16 %v254, %v253
  %v268 = vpack.c.b16 %v256, %v255
  %v269 = vpack.c.b16 %v258, %v257
  %v270 = vpack.c.b16 %v260, %v259
  %v271 = vpack.c.b16 %v262, %v261
  %v272 = vpack.c.b16 %v264, %v263
  %v277 = vunpack.c.l.b16 %v207
  %v278 = vunpack.c.h.b16 %v207
  %v279 = vunpack.c.l.b16 %v208
  %v280 = vunpack.c.h.b16 %v208
  %v281 = vunpack.c.l.b16 %v209
  %v282 = vunpack.c.h.b16 %v209
  %v283 = vunpack.c.l.b16 %v210
  %v284 = vunpack.c.h.b16 %v210
  %v285 = vpack.c.b16 %v281, %v277
  %v286 = vpack.c.b16 %v282, %v278
  %v287 = vpack.c.b16 %v283, %v279
  %v288 = vpack.c.b16 %v284, %v280
  %vm293 = vcmask 130048
  %v295 = vsel %vm293, %v265, 0
  %v298 = vsel %vm293, %v266, 0
  %v301 = vsel %vm293, %v267, 0
  %v304 = vsel %vm293, %v268, 0
  %v307 = vsel %vm293, %v269, 0
  %v310 = vsel %vm293, %v270, 0
  %v313 = vsel %vm293, %v271, 0
  %v316 = vsel %vm293, %v272, 0
  %318 = vmatprep.subr.bf16.mxu0 0
  %319 = vmatpush1.bf16.msra.mxu0 0
  %320 = vmatprep.subr.bf16.mxu0 0
  %321 = vmatpush1.bf16.msra.mxu0 0
  %322 = vmatprep.subr.bf16.mxu0 0
  %323 = vmatpush1.bf16.msra.mxu0 0
  %324 = vmatprep.subr.bf16.mxu0 0
  %325 = vmatpush1.bf16.msra.mxu0 0
  %326 = vmatprep.subr.bf16.mxu0 0
  %327 = vmatpush1.bf16.msra.mxu0 0
  %328 = vmatprep.subr.bf16.mxu0 0
  %329 = vmatpush1.bf16.msra.mxu0 0
  %330 = vmatprep.subr.bf16.mxu0 0
  %331 = vmatpush1.bf16.msra.mxu0 0
  %332 = vmatprep.subr.bf16.mxu0 %v286
  %333 = vmatpush1.bf16.msra.mxu0 %v285
  %334 = vmatprep.subr.bf16.mxu0 0
  %335 = vmatpush2.bf16.msra.mxu0 0
  %336 = vmatprep.subr.bf16.mxu0 0
  %337 = vmatpush2.bf16.msra.mxu0 0
  %338 = vmatprep.subr.bf16.mxu0 0
  %339 = vmatpush2.bf16.msra.mxu0 0
  %340 = vmatprep.subr.bf16.mxu0 0
  %341 = vmatpush2.bf16.msra.mxu0 0
  %342 = vmatprep.subr.bf16.mxu0 0
  %343 = vmatpush2.bf16.msra.mxu0 0
  %344 = vmatprep.subr.bf16.mxu0 0
  %345 = vmatpush2.bf16.msra.mxu0 0
  %346 = vmatprep.subr.bf16.mxu0 0
  %347 = vmatpush2.bf16.msra.mxu0 0
  %348 = vmatprep.subr.bf16.mxu0 0
  %349 = vmatpush2.bf16.msra.mxu0 0
  %350 = vmatprep.mubr.bf16.mxu0 0
  %351 = vmatmul.mubr.bf16.gmra.mxu0 %v295
  %v352 = vpop.f32.mrf.mxu0
  %v353 = vadd.f32 %v216, %v352
  %v354 = vpop.f32.mrf.mxu0
  %v355 = vadd.f32 %v220, %v354
  %v356 = vpop.f32.mrf.mxu0
  %v357 = vadd.f32 %v216, %v356
  %v358 = vpop.f32.mrf.mxu0
  %v359 = vadd.f32 %v220, %v358
  %360 = vmatprep.mubr.bf16.mxu0 0
  %361 = vmatmul.mubr.bf16.gmra.mxu0 %v298
  %v362 = vpop.f32.mrf.mxu0
  %v363 = vadd.f32 %v216, %v362
  %v364 = vpop.f32.mrf.mxu0
  %v365 = vadd.f32 %v220, %v364
  %v366 = vpop.f32.mrf.mxu0
  %v367 = vadd.f32 %v216, %v366
  %v368 = vpop.f32.mrf.mxu0
  %v369 = vadd.f32 %v220, %v368
  %370 = vmatprep.mubr.bf16.mxu0 0
  %371 = vmatmul.mubr.bf16.gmra.mxu0 %v301
  %v372 = vpop.f32.mrf.mxu0
  %v373 = vadd.f32 %v216, %v372
  %v374 = vpop.f32.mrf.mxu0
  %v375 = vadd.f32 %v220, %v374
  %v376 = vpop.f32.mrf.mxu0
  %v377 = vadd.f32 %v216, %v376
  %v378 = vpop.f32.mrf.mxu0
  %v379 = vadd.f32 %v220, %v378
  %380 = vmatprep.mubr.bf16.mxu0 0
  %381 = vmatmul.mubr.bf16.gmra.mxu0 %v304
  %v382 = vpop.f32.mrf.mxu0
  %v383 = vadd.f32 %v216, %v382
  %v384 = vpop.f32.mrf.mxu0
  %v385 = vadd.f32 %v220, %v384
  %v386 = vpop.f32.mrf.mxu0
  %v387 = vadd.f32 %v216, %v386
  %v388 = vpop.f32.mrf.mxu0
  %v389 = vadd.f32 %v220, %v388
  %390 = vmatprep.mubr.bf16.mxu0 0
  %391 = vmatmul.mubr.bf16.gmra.mxu0 %v307
  %v392 = vpop.f32.mrf.mxu0
  %v393 = vadd.f32 %v216, %v392
  %v394 = vpop.f32.mrf.mxu0
  %v395 = vadd.f32 %v220, %v394
  %v396 = vpop.f32.mrf.mxu0
  %v397 = vadd.f32 %v216, %v396
  %v398 = vpop.f32.mrf.mxu0
  %v399 = vadd.f32 %v220, %v398
  %400 = vmatprep.mubr.bf16.mxu0 0
  %401 = vmatmul.mubr.bf16.gmra.mxu0 %v310
  %v402 = vpop.f32.mrf.mxu0
  %v403 = vadd.f32 %v216, %v402
  %v404 = vpop.f32.mrf.mxu0
  %v405 = vadd.f32 %v220, %v404
  %v406 = vpop.f32.mrf.mxu0
  %v407 = vadd.f32 %v216, %v406
  %v408 = vpop.f32.mrf.mxu0
  %v409 = vadd.f32 %v220, %v408
  %410 = vmatprep.mubr.bf16.mxu0 0
  %411 = vmatmul.mubr.bf16.gmra.mxu0 %v313
  %v412 = vpop.f32.mrf.mxu0
  %v413 = vadd.f32 %v216, %v412
  %v414 = vpop.f32.mrf.mxu0
  %v415 = vadd.f32 %v220, %v414
  %v416 = vpop.f32.mrf.mxu0
  %v417 = vadd.f32 %v216, %v416
  %v418 = vpop.f32.mrf.mxu0
  %v419 = vadd.f32 %v220, %v418
  %420 = vmatprep.mubr.bf16.mxu0 0
  %421 = vmatmul.mubr.bf16.gmra.mxu0 %v316
  %v422 = vpop.f32.mrf.mxu0
  %v423 = vadd.f32 %v216, %v422
  %v424 = vpop.f32.mrf.mxu0
  %v425 = vadd.f32 %v220, %v424
  %v426 = vpop.f32.mrf.mxu0
  %v427 = vadd.f32 %v216, %v426
  %v428 = vpop.f32.mrf.mxu0
  %v429 = vadd.f32 %v220, %v428
  %430 = vdwg.mxu0
  %431 = vmatprep.subr.bf16.mxu0 0
  %432 = vmatpush1.bf16.msra.mxu0 0
  %433 = vmatprep.subr.bf16.mxu0 0
  %434 = vmatpush1.bf16.msra.mxu0 0
  %435 = vmatprep.subr.bf16.mxu0 0
  %436 = vmatpush1.bf16.msra.mxu0 0
  %437 = vmatprep.subr.bf16.mxu0 0
  %438 = vmatpush1.bf16.msra.mxu0 0
  %439 = vmatprep.subr.bf16.mxu0 0
  %440 = vmatpush1.bf16.msra.mxu0 0
  %441 = vmatprep.subr.bf16.mxu0 0
  %442 = vmatpush1.bf16.msra.mxu0 0
  %443 = vmatprep.subr.bf16.mxu0 0
  %444 = vmatpush1.bf16.msra.mxu0 0
  %445 = vmatprep.subr.bf16.mxu0 %v288
  %446 = vmatpush1.bf16.msra.mxu0 %v287
  %447 = vmatprep.subr.bf16.mxu0 0
  %448 = vmatpush2.bf16.msra.mxu0 0
  %449 = vmatprep.subr.bf16.mxu0 0
  %450 = vmatpush2.bf16.msra.mxu0 0
  %451 = vmatprep.subr.bf16.mxu0 0
  %452 = vmatpush2.bf16.msra.mxu0 0
  %453 = vmatprep.subr.bf16.mxu0 0
  %454 = vmatpush2.bf16.msra.mxu0 0
  %455 = vmatprep.subr.bf16.mxu0 0
  %456 = vmatpush2.bf16.msra.mxu0 0
  %457 = vmatprep.subr.bf16.mxu0 0
  %458 = vmatpush2.bf16.msra.mxu0 0
  %459 = vmatprep.subr.bf16.mxu0 0
  %460 = vmatpush2.bf16.msra.mxu0 0
  %461 = vmatprep.subr.bf16.mxu0 0
  %462 = vmatpush2.bf16.msra.mxu0 0
  %463 = vmatprep.mubr.bf16.mxu0 0
  %464 = vmatmul.mubr.bf16.gmra.mxu0 %v295
  %v465 = vpop.f32.mrf.mxu0
  %v466 = vadd.f32 %v224, %v465
  %v467 = vpop.f32.mrf.mxu0
  %v468 = vadd.f32 %v228, %v467
  %v469 = vpop.f32.mrf.mxu0
  %v470 = vadd.f32 %v224, %v469
  %v471 = vpop.f32.mrf.mxu0
  %v472 = vadd.f32 %v228, %v471
  %473 = vmatprep.mubr.bf16.mxu0 0
  %474 = vmatmul.mubr.bf16.gmra.mxu0 %v298
  %v475 = vpop.f32.mrf.mxu0
  %v476 = vadd.f32 %v224, %v475
  %v477 = vpop.f32.mrf.mxu0
  %v478 = vadd.f32 %v228, %v477
  %v479 = vpop.f32.mrf.mxu0
  %v480 = vadd.f32 %v224, %v479
  %v481 = vpop.f32.mrf.mxu0
  %v482 = vadd.f32 %v228, %v481
  %483 = vmatprep.mubr.bf16.mxu0 0
  %484 = vmatmul.mubr.bf16.gmra.mxu0 %v301
  %v485 = vpop.f32.mrf.mxu0
  %v486 = vadd.f32 %v224, %v485
  %v487 = vpop.f32.mrf.mxu0
  %v488 = vadd.f32 %v228, %v487
  %v489 = vpop.f32.mrf.mxu0
  %v490 = vadd.f32 %v224, %v489
  %v491 = vpop.f32.mrf.mxu0
  %v492 = vadd.f32 %v228, %v491
  %493 = vmatprep.mubr.bf16.mxu0 0
  %494 = vmatmul.mubr.bf16.gmra.mxu0 %v304
  %v495 = vpop.f32.mrf.mxu0
  %v496 = vadd.f32 %v224, %v495
  %v497 = vpop.f32.mrf.mxu0
  %v498 = vadd.f32 %v228, %v497
  %v499 = vpop.f32.mrf.mxu0
  %v500 = vadd.f32 %v224, %v499
  %v501 = vpop.f32.mrf.mxu0
  %v502 = vadd.f32 %v228, %v501
  %503 = vmatprep.mubr.bf16.mxu0 0
  %504 = vmatmul.mubr.bf16.gmra.mxu0 %v307
  %v505 = vpop.f32.mrf.mxu0
  %v506 = vadd.f32 %v224, %v505
  %v507 = vpop.f32.mrf.mxu0
  %v508 = vadd.f32 %v228, %v507
  %v509 = vpop.f32.mrf.mxu0
  %v510 = vadd.f32 %v224, %v509
  %v511 = vpop.f32.mrf.mxu0
  %v512 = vadd.f32 %v228, %v511
  %513 = vmatprep.mubr.bf16.mxu0 0
  %514 = vmatmul.mubr.bf16.gmra.mxu0 %v310
  %v515 = vpop.f32.mrf.mxu0
  %v516 = vadd.f32 %v224, %v515
  %v517 = vpop.f32.mrf.mxu0
  %v518 = vadd.f32 %v228, %v517
  %v519 = vpop.f32.mrf.mxu0
  %v520 = vadd.f32 %v224, %v519
  %v521 = vpop.f32.mrf.mxu0
  %v522 = vadd.f32 %v228, %v521
  %523 = vmatprep.mubr.bf16.mxu0 0
  %524 = vmatmul.mubr.bf16.gmra.mxu0 %v313
  %v525 = vpop.f32.mrf.mxu0
  %v526 = vadd.f32 %v224, %v525
  %v527 = vpop.f32.mrf.mxu0
  %v528 = vadd.f32 %v228, %v527
  %v529 = vpop.f32.mrf.mxu0
  %v530 = vadd.f32 %v224, %v529
  %v531 = vpop.f32.mrf.mxu0
  %v532 = vadd.f32 %v228, %v531
  %533 = vmatprep.mubr.bf16.mxu0 0
  %534 = vmatmul.mubr.bf16.gmra.mxu0 %v316
  %v535 = vpop.f32.mrf.mxu0
  %v536 = vadd.f32 %v224, %v535
  %v537 = vpop.f32.mrf.mxu0
  %v538 = vadd.f32 %v228, %v537
  %v539 = vpop.f32.mrf.mxu0
  %v540 = vadd.f32 %v224, %v539
  %v541 = vpop.f32.mrf.mxu0
  %v542 = vadd.f32 %v228, %v541
  %543 = vdwg.mxu0
  %544 = vst [vmem:[#allocation2] sm:$0xff] %v353
  %545 = vst [vmem:[#allocation2 + $0x8] sm:$0xff] %v355
  %546 = vst [vmem:[#allocation2 + $0x10] sm:$0xff] %v466
  %547 = vst [vmem:[#allocation2 + $0x18] sm:$0xff] %v468
  %548 = vst [vmem:[#allocation2 + $0x20] sm:$0xff] %v357
  %549 = vst [vmem:[#allocation2 + $0x28] sm:$0xff] %v359
  %550 = vst [vmem:[#allocation2 + $0x30] sm:$0xff] %v470
  %551 = vst [vmem:[#allocation2 + $0x38] sm:$0xff] %v472
  %552 = vst [vmem:[#allocation2 + $0x40] sm:$0xff] %v363
  %553 = vst [vmem:[#allocation2 + $0x48] sm:$0xff] %v365
  %554 = vst [vmem:[#allocation2 + $0x50] sm:$0xff] %v476
  %555 = vst [vmem:[#allocation2 + $0x58] sm:$0xff] %v478
  %556 = vst [vmem:[#allocation2 + $0x60] sm:$0xff] %v367
  %557 = vst [vmem:[#allocation2 + $0x68] sm:$0xff] %v369
  %558 = vst [vmem:[#allocation2 + $0x70] sm:$0xff] %v480
  %559 = vst [vmem:[#allocation2 + $0x78] sm:$0xff] %v482
  %560 = vst [vmem:[#allocation2 + $0x80] sm:$0xff] %v373
  %561 = vst [vmem:[#allocation2 + $0x88] sm:$0xff] %v375
  %562 = vst [vmem:[#allocation2 + $0x90] sm:$0xff] %v486
  %563 = vst [vmem:[#allocation2 + $0x98] sm:$0xff] %v488
  %564 = vst [vmem:[#allocation2 + $0xa0] sm:$0xff] %v377
  %565 = vst [vmem:[#allocation2 + $0xa8] sm:$0xff] %v379
  %566 = vst [vmem:[#allocation2 + $0xb0] sm:$0xff] %v490
  %567 = vst [vmem:[#allocation2 + $0xb8] sm:$0xff] %v492
  %568 = vst [vmem:[#allocation2 + $0xc0] sm:$0xff] %v383
  %569 = vst [vmem:[#allocation2 + $0xc8] sm:$0xff] %v385
  %570 = vst [vmem:[#allocation2 + $0xd0] sm:$0xff] %v496
  %571 = vst [vmem:[#allocation2 + $0xd8] sm:$0xff] %v498
  %572 = vst [vmem:[#allocation2 + $0xe0] sm:$0xff] %v387
  %573 = vst [vmem:[#allocation2 + $0xe8] sm:$0xff] %v389
  %574 = vst [vmem:[#allocation2 + $0xf0] sm:$0xff] %v500
  %575 = vst [vmem:[#allocation2 + $0xf8] sm:$0xff] %v502
  %576 = vst [vmem:[#allocation2 + $0x100] sm:$0xff] %v393
  %577 = vst [vmem:[#allocation2 + $0x108] sm:$0xff] %v395
  %578 = vst [vmem:[#allocation2 + $0x110] sm:$0xff] %v506
  %579 = vst [vmem:[#allocation2 + $0x118] sm:$0xff] %v508
  %580 = vst [vmem:[#allocation2 + $0x120] sm:$0xff] %v397
  %581 = vst [vmem:[#allocation2 + $0x128] sm:$0xff] %v399
  %582 = vst [vmem:[#allocation2 + $0x130] sm:$0xff] %v510
  %583 = vst [vmem:[#allocation2 + $0x138] sm:$0xff] %v512
  %584 = vst [vmem:[#allocation2 + $0x140] sm:$0xff] %v403
  %585 = vst [vmem:[#allocation2 + $0x148] sm:$0xff] %v405
  %586 = vst [vmem:[#allocation2 + $0x150] sm:$0xff] %v516
  %587 = vst [vmem:[#allocation2 + $0x158] sm:$0xff] %v518
  %588 = vst [vmem:[#allocation2 + $0x160] sm:$0xff] %v407
  %589 = vst [vmem:[#allocation2 + $0x168] sm:$0xff] %v409
  %590 = vst [vmem:[#allocation2 + $0x170] sm:$0xff] %v520
  %591 = vst [vmem:[#allocation2 + $0x178] sm:$0xff] %v522
  %592 = vst [vmem:[#allocation2 + $0x180] sm:$0xff] %v413
  %593 = vst [vmem:[#allocation2 + $0x188] sm:$0xff] %v415
  %594 = vst [vmem:[#allocation2 + $0x190] sm:$0xff] %v526
  %595 = vst [vmem:[#allocation2 + $0x198] sm:$0xff] %v528
  %596 = vst [vmem:[#allocation2 + $0x1a0] sm:$0xff] %v417
  %597 = vst [vmem:[#allocation2 + $0x1a8] sm:$0xff] %v419
  %598 = vst [vmem:[#allocation2 + $0x1b0] sm:$0xff] %v530
  %599 = vst [vmem:[#allocation2 + $0x1b8] sm:$0xff] %v532
  %600 = vst [vmem:[#allocation2 + $0x1c0] sm:$0xff] %v423
  %601 = vst [vmem:[#allocation2 + $0x1c8] sm:$0xff] %v425
  %602 = vst [vmem:[#allocation2 + $0x1d0] sm:$0xff] %v536
  %603 = vst [vmem:[#allocation2 + $0x1d8] sm:$0xff] %v538
  %604 = vst [vmem:[#allocation2 + $0x1e0] sm:$0xff] %v427
  %605 = vst [vmem:[#allocation2 + $0x1e8] sm:$0xff] %v429
  %606 = vst [vmem:[#allocation2 + $0x1f0] sm:$0xff] %v540
  %607 = vst [vmem:[#allocation2 + $0x1f8] sm:$0xff] %v542
  %v608 = vld [vmem:[#allocation3] sm:$0xff]
  %v609 = vld [vmem:[#allocation3 + $0x8] sm:$0xff]
  %v610 = vld [vmem:[#allocation4] sm:$0xff]
  %v611 = vld [vmem:[#allocation4 + $0x8] sm:$0xff]
  %s612 = smul.u32 0, 4
  %s613 = smul.addr %s612, 8
  %s614 = scalar_lea.vmem [#allocation2], %s613
  %v615 = vld [vmem:[%s614] sm:$0xff]
  %v616 = vld [vmem:[%s614 + $0x8] sm:$0xff]
  %v617 = vld [vmem:[%s614 + $0x10] sm:$0xff]
  %v618 = vld [vmem:[%s614 + $0x18] sm:$0xff]
  %v619 = vld [vmem:[%s614 + $0x20] sm:$0xff]
  %v620 = vld [vmem:[%s614 + $0x28] sm:$0xff]
  %v621 = vld [vmem:[%s614 + $0x30] sm:$0xff]
  %v622 = vld [vmem:[%s614 + $0x38] sm:$0xff]
  %v623 = vpack.c.bf16 %v609, %v608
  %v624 = vld [vmem:[#allocation6] sm:$0xff]
  %v625 = vld [vmem:[#allocation6 + $0x8] sm:$0xff]
  %v626 = vld [vmem:[#allocation6 + $0x10] sm:$0xff]
  %v627 = vld [vmem:[#allocation6 + $0x18] sm:$0xff]
  %v628 = vld [vmem:[#allocation6 + $0x20] sm:$0xff]
  %v629 = vld [vmem:[#allocation6 + $0x28] sm:$0xff]
  %v630 = vld [vmem:[#allocation6 + $0x30] sm:$0xff]
  %v631 = vld [vmem:[#allocation6 + $0x38] sm:$0xff]
  %v632 = vld [vmem:[#allocation6 + $0x40] sm:$0xff]
  %v633 = vld [vmem:[#allocation6 + $0x48] sm:$0xff]
  %v634 = vld [vmem:[#allocation6 + $0x50] sm:$0xff]
  %v635 = vld [vmem:[#allocation6 + $0x58] sm:$0xff]
  %v636 = vld [vmem:[#allocation6 + $0x60] sm:$0xff]
  %v637 = vld [vmem:[#allocation6 + $0x68] sm:$0xff]
  %v638 = vld [vmem:[#allocation6 + $0x70] sm:$0xff]
  %v639 = vld [vmem:[#allocation6 + $0x78] sm:$0xff]
  %v640 = vld [vmem:[#allocation6 + $0x80] sm:$0xff]
  %v641 = vld [vmem:[#allocation6 + $0x88] sm:$0xff]
  %v642 = vld [vmem:[#allocation6 + $0x90] sm:$0xff]
  %v643 = vld [vmem:[#allocation6 + $0x98] sm:$0xff]
  %v644 = vld [vmem:[#allocation6 + $0xa0] sm:$0xff]
  %v645 = vld [vmem:[#allocation6 + $0xa8] sm:$0xff]
  %v646 = vld [vmem:[#allocation6 + $0xb0] sm:$0xff]
  %v647 = vld [vmem:[#allocation6 + $0xb8] sm:$0xff]
  %v648 = vld [vmem:[#allocation6 + $0xc0] sm:$0xff]
  %v649 = vld [vmem:[#allocation6 + $0xc8] sm:$0xff]
  %v650 = vld [vmem:[#allocation6 + $0xd0] sm:$0xff]
  %v651 = vld [vmem:[#allocation6 + $0xd8] sm:$0xff]
  %v652 = vld [vmem:[#allocation6 + $0xe0] sm:$0xff]
  %v653 = vld [vmem:[#allocation6 + $0xe8] sm:$0xff]
  %v654 = vld [vmem:[#allocation6 + $0xf0] sm:$0xff]
  %v655 = vld [vmem:[#allocation6 + $0xf8] sm:$0xff]
  %v688 = vunpack.c.l.b16 %v624
  %v689 = vunpack.c.h.b16 %v624
  %v690 = vunpack.c.l.b16 %v625
  %v691 = vunpack.c.h.b16 %v625
  %v692 = vunpack.c.l.b16 %v626
  %v693 = vunpack.c.h.b16 %v626
  %v694 = vunpack.c.l.b16 %v627
  %v695 = vunpack.c.h.b16 %v627
  %v696 = vunpack.c.l.b16 %v628
  %v697 = vunpack.c.h.b16 %v628
  %v698 = vunpack.c.l.b16 %v629
  %v699 = vunpack.c.h.b16 %v629
  %v700 = vunpack.c.l.b16 %v630
  %v701 = vunpack.c.h.b16 %v630
  %v702 = vunpack.c.l.b16 %v631
  %v703 = vunpack.c.h.b16 %v631
  %v704 = vunpack.c.l.b16 %v632
  %v705 = vunpack.c.h.b16 %v632
  %v706 = vunpack.c.l.b16 %v633
  %v707 = vunpack.c.h.b16 %v633
  %v708 = vunpack.c.l.b16 %v634
  %v709 = vunpack.c.h.b16 %v634
  %v710 = vunpack.c.l.b16 %v635
  %v711 = vunpack.c.h.b16 %v635
  %v712 = vunpack.c.l.b16 %v636
  %v713 = vunpack.c.h.b16 %v636
  %v714 = vunpack.c.l.b16 %v637
  %v715 = vunpack.c.h.b16 %v637
  %v716 = vunpack.c.l.b16 %v638
  %v717 = vunpack.c.h.b16 %v638
  %v718 = vunpack.c.l.b16 %v639
  %v719 = vunpack.c.h.b16 %v639
  %v720 = vunpack.c.l.b16 %v640
  %v721 = vunpack.c.h.b16 %v640
  %v722 = vunpack.c.l.b16 %v641
  %v723 = vunpack.c.h.b16 %v641
  %v724 = vunpack.c.l.b16 %v642
  %v725 = vunpack.c.h.b16 %v642
  %v726 = vunpack.c.l.b16 %v643
  %v727 = vunpack.c.h.b16 %v643
  %v728 = vunpack.c.l.b16 %v644
  %v729 = vunpack.c.h.b16 %v644
  %v730 = vunpack.c.l.b16 %v645
  %v731 = vunpack.c.h.b16 %v645
  %v732 = vunpack.c.l.b16 %v646
  %v733 = vunpack.c.h.b16 %v646
  %v734 = vunpack.c.l.b16 %v647
  %v735 = vunpack.c.h.b16 %v647
  %v736 = vunpack.c.l.b16 %v648
  %v737 = vunpack.c.h.b16 %v648
  %v738 = vunpack.c.l.b16 %v649
  %v739 = vunpack.c.h.b16 %v649
  %v740 = vunpack.c.l.b16 %v650
  %v741 = vunpack.c.h.b16 %v650
  %v742 = vunpack.c.l.b16 %v651
  %v743 = vunpack.c.h.b16 %v651
  %v744 = vunpack.c.l.b16 %v652
  %v745 = vunpack.c.h.b16 %v652
  %v746 = vunpack.c.l.b16 %v653
  %v747 = vunpack.c.h.b16 %v653
  %v748 = vunpack.c.l.b16 %v654
  %v749 = vunpack.c.h.b16 %v654
  %v750 = vunpack.c.l.b16 %v655
  %v751 = vunpack.c.h.b16 %v655
  %v752 = vpack.c.b16 %v692, %v688
  %v753 = vpack.c.b16 %v693, %v689
  %v754 = vpack.c.b16 %v694, %v690
  %v755 = vpack.c.b16 %v695, %v691
  %v756 = vpack.c.b16 %v700, %v696
  %v757 = vpack.c.b16 %v701, %v697
  %v758 = vpack.c.b16 %v702, %v698
  %v759 = vpack.c.b16 %v703, %v699
  %v760 = vpack.c.b16 %v708, %v704
  %v761 = vpack.c.b16 %v709, %v705
  %v762 = vpack.c.b16 %v710, %v706
  %v763 = vpack.c.b16 %v711, %v707
  %v764 = vpack.c.b16 %v716, %v712
  %v765 = vpack.c.b16 %v717, %v713
  %v766 = vpack.c.b16 %v718, %v714
  %v767 = vpack.c.b16 %v719, %v715
  %v768 = vpack.c.b16 %v724, %v720
  %v769 = vpack.c.b16 %v725, %v721
  %v770 = vpack.c.b16 %v726, %v722
  %v771 = vpack.c.b16 %v727, %v723
  %v772 = vpack.c.b16 %v732, %v728
  %v773 = vpack.c.b16 %v733, %v729
  %v774 = vpack.c.b16 %v734, %v730
  %v775 = vpack.c.b16 %v735, %v731
  %v776 = vpack.c.b16 %v740, %v736
  %v777 = vpack.c.b16 %v741, %v737
  %v778 = vpack.c.b16 %v742, %v738
  %v779 = vpack.c.b16 %v743, %v739
  %v780 = vpack.c.b16 %v748, %v744
  %v781 = vpack.c.b16 %v749, %v745
  %v782 = vpack.c.b16 %v750, %v746
  %v783 = vpack.c.b16 %v751, %v747
  %816 = vmatprep.subr.bf16.mxu0 %v781
  %817 = vmatpush1.bf16.msra.mxu0 %v780
  %818 = vmatprep.subr.bf16.mxu0 %v777
  %819 = vmatpush1.bf16.msra.mxu0 %v776
  %820 = vmatprep.subr.bf16.mxu0 %v773
  %821 = vmatpush1.bf16.msra.mxu0 %v772
  %822 = vmatprep.subr.bf16.mxu0 %v769
  %823 = vmatpush1.bf16.msra.mxu0 %v768
  %824 = vmatprep.subr.bf16.mxu0 %v765
  %825 = vmatpush1.bf16.msra.mxu0 %v764
  %826 = vmatprep.subr.bf16.mxu0 %v761
  %827 = vmatpush1.bf16.msra.mxu0 %v760
  %828 = vmatprep.subr.bf16.mxu0 %v757
  %829 = vmatpush1.bf16.msra.mxu0 %v756
  %830 = vmatprep.subr.bf16.mxu0 %v753
  %831 = vmatpush1.bf16.msra.mxu0 %v752
  %832 = vmatprep.subr.bf16.mxu0 0
  %833 = vmatpush2.bf16.msra.mxu0 0
  %834 = vmatprep.subr.bf16.mxu0 0
  %835 = vmatpush2.bf16.msra.mxu0 0
  %836 = vmatprep.subr.bf16.mxu0 0
  %837 = vmatpush2.bf16.msra.mxu0 0
  %838 = vmatprep.subr.bf16.mxu0 0
  %839 = vmatpush2.bf16.msra.mxu0 0
  %840 = vmatprep.subr.bf16.mxu0 0
  %841 = vmatpush2.bf16.msra.mxu0 0
  %842 = vmatprep.subr.bf16.mxu0 0
  %843 = vmatpush2.bf16.msra.mxu0 0
  %844 = vmatprep.subr.bf16.mxu0 0
  %845 = vmatpush2.bf16.msra.mxu0 0
  %846 = vmatprep.subr.bf16.mxu0 0
  %847 = vmatpush2.bf16.msra.mxu0 0
  %848 = vmatprep.mubr.bf16.mxu0 0
  %849 = vmatmul.mubr.bf16.gmra.mxu0 %v623
  %v850 = vpop.f32.mrf.mxu0
  %v851 = vadd.f32 0.0, %v850
  %v852 = vpop.f32.mrf.mxu0
  %v853 = vadd.f32 0.0, %v852
  %v854 = vpop.f32.mrf.mxu0
  %v855 = vadd.f32 0.0, %v854
  %v856 = vpop.f32.mrf.mxu0
  %v857 = vadd.f32 0.0, %v856
  %858 = vdwg.mxu0
  %859 = vmatprep.subr.bf16.mxu0 %v783
  %860 = vmatpush1.bf16.msra.mxu0 %v782
  %861 = vmatprep.subr.bf16.mxu0 %v779
  %862 = vmatpush1.bf16.msra.mxu0 %v778
  %863 = vmatprep.subr.bf16.mxu0 %v775
  %864 = vmatpush1.bf16.msra.mxu0 %v774
  %865 = vmatprep.subr.bf16.mxu0 %v771
  %866 = vmatpush1.bf16.msra.mxu0 %v770
  %867 = vmatprep.subr.bf16.mxu0 %v767
  %868 = vmatpush1.bf16.msra.mxu0 %v766
  %869 = vmatprep.subr.bf16.mxu0 %v763
  %870 = vmatpush1.bf16.msra.mxu0 %v762
  %871 = vmatprep.subr.bf16.mxu0 %v759
  %872 = vmatpush1.bf16.msra.mxu0 %v758
  %873 = vmatprep.subr.bf16.mxu0 %v755
  %874 = vmatpush1.bf16.msra.mxu0 %v754
  %875 = vmatprep.subr.bf16.mxu0 0
  %876 = vmatpush2.bf16.msra.mxu0 0
  %877 = vmatprep.subr.bf16.mxu0 0
  %878 = vmatpush2.bf16.msra.mxu0 0
  %879 = vmatprep.subr.bf16.mxu0 0
  %880 = vmatpush2.bf16.msra.mxu0 0
  %881 = vmatprep.subr.bf16.mxu0 0
  %882 = vmatpush2.bf16.msra.mxu0 0
  %883 = vmatprep.subr.bf16.mxu0 0
  %884 = vmatpush2.bf16.msra.mxu0 0
  %885 = vmatprep.subr.bf16.mxu0 0
  %886 = vmatpush2.bf16.msra.mxu0 0
  %887 = vmatprep.subr.bf16.mxu0 0
  %888 = vmatpush2.bf16.msra.mxu0 0
  %889 = vmatprep.subr.bf16.mxu0 0
  %890 = vmatpush2.bf16.msra.mxu0 0
  %891 = vmatprep.mubr.bf16.mxu0 0
  %892 = vmatmul.mubr.bf16.gmra.mxu0 %v623
  %v893 = vpop.f32.mrf.mxu0
  %v894 = vadd.f32 0.0, %v893
  %v895 = vpop.f32.mrf.mxu0
  %v896 = vadd.f32 0.0, %v895
  %v897 = vpop.f32.mrf.mxu0
  %v898 = vadd.f32 0.0, %v897
  %v899 = vpop.f32.mrf.mxu0
  %v900 = vadd.f32 0.0, %v899
  %901 = vdwg.mxu0
  %v902 = vadd.f32 %v615, %v851
  %v903 = vadd.f32 %v616, %v853
  %v904 = vadd.f32 %v617, %v894
  %v905 = vadd.f32 %v618, %v896
  %v906 = vadd.f32 %v619, %v855
  %v907 = vadd.f32 %v620, %v857
  %v908 = vadd.f32 %v621, %v898
  %v909 = vadd.f32 %v622, %v900
  %v910 = vxor.u32 %v902, 2147483648
  %v911 = vxor.u32 %v903, 2147483648
  %v912 = vxor.u32 %v904, 2147483648
  %v913 = vxor.u32 %v906, 2147483648
  %v914 = vxor.u32 %v907, 2147483648
  %v915 = vxor.u32 %v908, 2147483648
  %v916 = vmul.f32 %v910, 1.442695
  %v917 = vpow.pop %v916
  %v918 = vmul.f32 %v911, 1.442695
  %v919 = vpow.pop %v918
  %v920 = vmul.f32 %v912, 1.442695
  %v921 = vpow.pop %v920
  %v922 = vmul.f32 %v913, 1.442695
  %v923 = vpow.pop %v922
  %v924 = vmul.f32 %v914, 1.442695
  %v925 = vpow.pop %v924
  %v926 = vmul.f32 %v915, 1.442695
  %v927 = vpow.pop %v926
  %v928 = vadd.f32 %v917, 1.0
  %v929 = vadd.f32 %v919, 1.0
  %v930 = vadd.f32 %v921, 1.0
  %v931 = vadd.f32 %v923, 1.0
  %v932 = vadd.f32 %v925, 1.0
  %v933 = vadd.f32 %v927, 1.0
  %v934 = vrcp.pop %v928
  %v935 = vmul.f32 1.0, %v934
  %v936 = vrcp.pop %v929
  %v937 = vmul.f32 1.0, %v936
  %v938 = vrcp.pop %v930
  %v939 = vmul.f32 1.0, %v938
  %v940 = vrcp.pop %v931
  %v941 = vmul.f32 1.0, %v940
  %v942 = vrcp.pop %v932
  %v943 = vmul.f32 1.0, %v942
  %v944 = vrcp.pop %v933
  %v945 = vmul.f32 1.0, %v944
  %v946 = vtanh.pop %v905
  %v947 = vtanh.pop %v909
  %v948 = vmul.f32 %v937, %v610
  %v949 = vmul.f32 %v943, %v611
  %v950 = vmul.f32 %v935, %v946
  %v951 = vmul.f32 %v941, %v947
  %v952 = vadd.f32 %v948, %v950
  %v953 = vadd.f32 %v949, %v951
  %v954 = vtanh.pop %v952
  %v955 = vtanh.pop %v953
  %v956 = vmul.f32 %v939, %v954
  %v957 = vmul.f32 %v945, %v955
  %s958 = smul.u32 2, 4
  %s959 = smul.addr %s958, 8
  %s960 = scalar_lea.vmem [#allocation2], %s959
  %v961 = vld [vmem:[%s960] sm:$0xff]
  %v962 = vld [vmem:[%s960 + $0x8] sm:$0xff]
  %v963 = vld [vmem:[%s960 + $0x10] sm:$0xff]
  %v964 = vld [vmem:[%s960 + $0x18] sm:$0xff]
  %v965 = vld [vmem:[%s960 + $0x20] sm:$0xff]
  %v966 = vld [vmem:[%s960 + $0x28] sm:$0xff]
  %v967 = vld [vmem:[%s960 + $0x30] sm:$0xff]
  %v968 = vld [vmem:[%s960 + $0x38] sm:$0xff]
  %v969 = vpack.c.bf16 %v957, %v956
  %970 = vmatprep.subr.bf16.mxu0 %v781
  %971 = vmatpush1.bf16.msra.mxu0 %v780
  %972 = vmatprep.subr.bf16.mxu0 %v777
  %973 = vmatpush1.bf16.msra.mxu0 %v776
  %974 = vmatprep.subr.bf16.mxu0 %v773
  %975 = vmatpush1.bf16.msra.mxu0 %v772
  %976 = vmatprep.subr.bf16.mxu0 %v769
  %977 = vmatpush1.bf16.msra.mxu0 %v768
  %978 = vmatprep.subr.bf16.mxu0 %v765
  %979 = vmatpush1.bf16.msra.mxu0 %v764
  %980 = vmatprep.subr.bf16.mxu0 %v761
  %981 = vmatpush1.bf16.msra.mxu0 %v760
  %982 = vmatprep.subr.bf16.mxu0 %v757
  %983 = vmatpush1.bf16.msra.mxu0 %v756
  %984 = vmatprep.subr.bf16.mxu0 %v753
  %985 = vmatpush1.bf16.msra.mxu0 %v752
  %986 = vmatprep.subr.bf16.mxu0 0
  %987 = vmatpush2.bf16.msra.mxu0 0
  %988 = vmatprep.subr.bf16.mxu0 0
  %989 = vmatpush2.bf16.msra.mxu0 0
  %990 = vmatprep.subr.bf16.mxu0 0
  %991 = vmatpush2.bf16.msra.mxu0 0
  %992 = vmatprep.subr.bf16.mxu0 0
  %993 = vmatpush2.bf16.msra.mxu0 0
  %994 = vmatprep.subr.bf16.mxu0 0
  %995 = vmatpush2.bf16.msra.mxu0 0
  %996 = vmatprep.subr.bf16.mxu0 0
  %997 = vmatpush2.bf16.msra.mxu0 0
  %998 = vmatprep.subr.bf16.mxu0 0
  %999 = vmatpush2.bf16.msra.mxu0 0
  %1000 = vmatprep.subr.bf16.mxu0 0
  %1001 = vmatpush2.bf16.msra.mxu0 0
  %1002 = vmatprep.mubr.bf16.mxu0 0
  %1003 = vmatmul.mubr.bf16.gmra.mxu0 %v969
  %v1004 = vpop.f32.mrf.mxu0
  %v1005 = vadd.f32 0.0, %v1004
  %v1006 = vpop.f32.mrf.mxu0
  %v1007 = vadd.f32 0.0, %v1006
  %v1008 = vpop.f32.mrf.mxu0
  %v1009 = vadd.f32 0.0, %v1008
  %v1010 = vpop.f32.mrf.mxu0
  %v1011 = vadd.f32 0.0, %v1010
  %1012 = vdwg.mxu0
  %1013 = vmatprep.subr.bf16.mxu0 %v783
  %1014 = vmatpush1.bf16.msra.mxu0 %v782
  %1015 = vmatprep.subr.bf16.mxu0 %v779
  %1016 = vmatpush1.bf16.msra.mxu0 %v778
  %1017 = vmatprep.subr.bf16.mxu0 %v775
  %1018 = vmatpush1.bf16.msra.mxu0 %v774
  %1019 = vmatprep.subr.bf16.mxu0 %v771
  %1020 = vmatpush1.bf16.msra.mxu0 %v770
  %1021 = vmatprep.subr.bf16.mxu0 %v767
  %1022 = vmatpush1.bf16.msra.mxu0 %v766
  %1023 = vmatprep.subr.bf16.mxu0 %v763
  %1024 = vmatpush1.bf16.msra.mxu0 %v762
  %1025 = vmatprep.subr.bf16.mxu0 %v759
  %1026 = vmatpush1.bf16.msra.mxu0 %v758
  %1027 = vmatprep.subr.bf16.mxu0 %v755
  %1028 = vmatpush1.bf16.msra.mxu0 %v754
  %1029 = vmatprep.subr.bf16.mxu0 0
  %1030 = vmatpush2.bf16.msra.mxu0 0
  %1031 = vmatprep.subr.bf16.mxu0 0
  %1032 = vmatpush2.bf16.msra.mxu0 0
  %1033 = vmatprep.subr.bf16.mxu0 0
  %1034 = vmatpush2.bf16.msra.mxu0 0
  %1035 = vmatprep.subr.bf16.mxu0 0
  %1036 = vmatpush2.bf16.msra.mxu0 0
  %1037 = vmatprep.subr.bf16.mxu0 0
  %1038 = vmatpush2.bf16.msra.mxu0 0
  %1039 = vmatprep.subr.bf16.mxu0 0
  %1040 = vmatpush2.bf16.msra.mxu0 0
  %1041 = vmatprep.subr.bf16.mxu0 0
  %1042 = vmatpush2.bf16.msra.mxu0 0
  %1043 = vmatprep.subr.bf16.mxu0 0
  %1044 = vmatpush2.bf16.msra.mxu0 0
  %1045 = vmatprep.mubr.bf16.mxu0 0
  %1046 = vmatmul.mubr.bf16.gmra.mxu0 %v969
  %v1047 = vpop.f32.mrf.mxu0
  %v1048 = vadd.f32 0.0, %v1047
  %v1049 = vpop.f32.mrf.mxu0
  %v1050 = vadd.f32 0.0, %v1049
  %v1051 = vpop.f32.mrf.mxu0
  %v1052 = vadd.f32 0.0, %v1051
  %v1053 = vpop.f32.mrf.mxu0
  %v1054 = vadd.f32 0.0, %v1053
  %1055 = vdwg.mxu0
  %v1056 = vadd.f32 %v961, %v1005
  %v1057 = vadd.f32 %v962, %v1007
  %v1058 = vadd.f32 %v963, %v1048
  %v1059 = vadd.f32 %v964, %v1050
  %v1060 = vadd.f32 %v965, %v1009
  %v1061 = vadd.f32 %v966, %v1011
  %v1062 = vadd.f32 %v967, %v1052
  %v1063 = vadd.f32 %v968, %v1054
  %v1064 = vxor.u32 %v1056, 2147483648
  %v1065 = vxor.u32 %v1057, 2147483648
  %v1066 = vxor.u32 %v1058, 2147483648
  %v1067 = vxor.u32 %v1060, 2147483648
  %v1068 = vxor.u32 %v1061, 2147483648
  %v1069 = vxor.u32 %v1062, 2147483648
  %v1070 = vmul.f32 %v1064, 1.442695
  %v1071 = vpow.pop %v1070
  %v1072 = vmul.f32 %v1065, 1.442695
  %v1073 = vpow.pop %v1072
  %v1074 = vmul.f32 %v1066, 1.442695
  %v1075 = vpow.pop %v1074
  %v1076 = vmul.f32 %v1067, 1.442695
  %v1077 = vpow.pop %v1076
  %v1078 = vmul.f32 %v1068, 1.442695
  %v1079 = vpow.pop %v1078
  %v1080 = vmul.f32 %v1069, 1.442695
  %v1081 = vpow.pop %v1080
  %v1082 = vadd.f32 %v1071, 1.0
  %v1083 = vadd.f32 %v1073, 1.0
  %v1084 = vadd.f32 %v1075, 1.0
  %v1085 = vadd.f32 %v1077, 1.0
  %v1086 = vadd.f32 %v1079, 1.0
  %v1087 = vadd.f32 %v1081, 1.0
  %v1088 = vrcp.pop %v1082
  %v1089 = vmul.f32 1.0, %v1088
  %v1090 = vrcp.pop %v1083
  %v1091 = vmul.f32 1.0, %v1090
  %v1092 = vrcp.pop %v1084
  %v1093 = vmul.f32 1.0, %v1092
  %v1094 = vrcp.pop %v1085
  %v1095 = vmul.f32 1.0, %v1094
  %v1096 = vrcp.pop %v1086
  %v1097 = vmul.f32 1.0, %v1096
  %v1098 = vrcp.pop %v1087
  %v1099 = vmul.f32 1.0, %v1098
  %v1100 = vtanh.pop %v1059
  %v1101 = vtanh.pop %v1063
  %v1102 = vmul.f32 %v1091, %v952
  %v1103 = vmul.f32 %v1097, %v953
  %v1104 = vmul.f32 %v1089, %v1100
  %v1105 = vmul.f32 %v1095, %v1101
  %v1106 = vadd.f32 %v1102, %v1104
  %v1107 = vadd.f32 %v1103, %v1105
  %v1108 = vtanh.pop %v1106
  %v1109 = vtanh.pop %v1107
  %v1110 = vmul.f32 %v1093, %v1108
  %v1111 = vmul.f32 %v1099, %v1109
  %s1112 = smul.u32 4, 4
  %s1113 = smul.addr %s1112, 8
  %s1114 = scalar_lea.vmem [#allocation2], %s1113
  %v1115 = vld [vmem:[%s1114] sm:$0xff]
  %v1116 = vld [vmem:[%s1114 + $0x8] sm:$0xff]
  %v1117 = vld [vmem:[%s1114 + $0x10] sm:$0xff]
  %v1118 = vld [vmem:[%s1114 + $0x18] sm:$0xff]
  %v1119 = vld [vmem:[%s1114 + $0x20] sm:$0xff]
  %v1120 = vld [vmem:[%s1114 + $0x28] sm:$0xff]
  %v1121 = vld [vmem:[%s1114 + $0x30] sm:$0xff]
  %v1122 = vld [vmem:[%s1114 + $0x38] sm:$0xff]
  %v1123 = vpack.c.bf16 %v1111, %v1110
  %1124 = vmatprep.subr.bf16.mxu0 %v781
  %1125 = vmatpush1.bf16.msra.mxu0 %v780
  %1126 = vmatprep.subr.bf16.mxu0 %v777
  %1127 = vmatpush1.bf16.msra.mxu0 %v776
  %1128 = vmatprep.subr.bf16.mxu0 %v773
  %1129 = vmatpush1.bf16.msra.mxu0 %v772
  %1130 = vmatprep.subr.bf16.mxu0 %v769
  %1131 = vmatpush1.bf16.msra.mxu0 %v768
  %1132 = vmatprep.subr.bf16.mxu0 %v765
  %1133 = vmatpush1.bf16.msra.mxu0 %v764
  %1134 = vmatprep.subr.bf16.mxu0 %v761
  %1135 = vmatpush1.bf16.msra.mxu0 %v760
  %1136 = vmatprep.subr.bf16.mxu0 %v757
  %1137 = vmatpush1.bf16.msra.mxu0 %v756
  %1138 = vmatprep.subr.bf16.mxu0 %v753
  %1139 = vmatpush1.bf16.msra.mxu0 %v752
  %1140 = vmatprep.subr.bf16.mxu0 0
  %1141 = vmatpush2.bf16.msra.mxu0 0
  %1142 = vmatprep.subr.bf16.mxu0 0
  %1143 = vmatpush2.bf16.msra.mxu0 0
  %1144 = vmatprep.subr.bf16.mxu0 0
  %1145 = vmatpush2.bf16.msra.mxu0 0
  %1146 = vmatprep.subr.bf16.mxu0 0
  %1147 = vmatpush2.bf16.msra.mxu0 0
  %1148 = vmatprep.subr.bf16.mxu0 0
  %1149 = vmatpush2.bf16.msra.mxu0 0
  %1150 = vmatprep.subr.bf16.mxu0 0
  %1151 = vmatpush2.bf16.msra.mxu0 0
  %1152 = vmatprep.subr.bf16.mxu0 0
  %1153 = vmatpush2.bf16.msra.mxu0 0
  %1154 = vmatprep.subr.bf16.mxu0 0
  %1155 = vmatpush2.bf16.msra.mxu0 0
  %1156 = vmatprep.mubr.bf16.mxu0 0
  %1157 = vmatmul.mubr.bf16.gmra.mxu0 %v1123
  %v1158 = vpop.f32.mrf.mxu0
  %v1159 = vadd.f32 0.0, %v1158
  %v1160 = vpop.f32.mrf.mxu0
  %v1161 = vadd.f32 0.0, %v1160
  %v1162 = vpop.f32.mrf.mxu0
  %v1163 = vadd.f32 0.0, %v1162
  %v1164 = vpop.f32.mrf.mxu0
  %v1165 = vadd.f32 0.0, %v1164
  %1166 = vdwg.mxu0
  %1167 = vmatprep.subr.bf16.mxu0 %v783
  %1168 = vmatpush1.bf16.msra.mxu0 %v782
  %1169 = vmatprep.subr.bf16.mxu0 %v779
  %1170 = vmatpush1.bf16.msra.mxu0 %v778
  %1171 = vmatprep.subr.bf16.mxu0 %v775
  %1172 = vmatpush1.bf16.msra.mxu0 %v774
  %1173 = vmatprep.subr.bf16.mxu0 %v771
  %1174 = vmatpush1.bf16.msra.mxu0 %v770
  %1175 = vmatprep.subr.bf16.mxu0 %v767
  %1176 = vmatpush1.bf16.msra.mxu0 %v766
  %1177 = vmatprep.subr.bf16.mxu0 %v763
  %1178 = vmatpush1.bf16.msra.mxu0 %v762
  %1179 = vmatprep.subr.bf16.mxu0 %v759
  %1180 = vmatpush1.bf16.msra.mxu0 %v758
  %1181 = vmatprep.subr.bf16.mxu0 %v755
  %1182 = vmatpush1.bf16.msra.mxu0 %v754
  %1183 = vmatprep.subr.bf16.mxu0 0
  %1184 = vmatpush2.bf16.msra.mxu0 0
  %1185 = vmatprep.subr.bf16.mxu0 0
  %1186 = vmatpush2.bf16.msra.mxu0 0
  %1187 = vmatprep.subr.bf16.mxu0 0
  %1188 = vmatpush2.bf16.msra.mxu0 0
  %1189 = vmatprep.subr.bf16.mxu0 0
  %1190 = vmatpush2.bf16.msra.mxu0 0
  %1191 = vmatprep.subr.bf16.mxu0 0
  %1192 = vmatpush2.bf16.msra.mxu0 0
  %1193 = vmatprep.subr.bf16.mxu0 0
  %1194 = vmatpush2.bf16.msra.mxu0 0
  %1195 = vmatprep.subr.bf16.mxu0 0
  %1196 = vmatpush2.bf16.msra.mxu0 0
  %1197 = vmatprep.subr.bf16.mxu0 0
  %1198 = vmatpush2.bf16.msra.mxu0 0
  %1199 = vmatprep.mubr.bf16.mxu0 0
  %1200 = vmatmul.mubr.bf16.gmra.mxu0 %v1123
  %v1201 = vpop.f32.mrf.mxu0
  %v1202 = vadd.f32 0.0, %v1201
  %v1203 = vpop.f32.mrf.mxu0
  %v1204 = vadd.f32 0.0, %v1203
  %v1205 = vpop.f32.mrf.mxu0
  %v1206 = vadd.f32 0.0, %v1205
  %v1207 = vpop.f32.mrf.mxu0
  %v1208 = vadd.f32 0.0, %v1207
  %1209 = vdwg.mxu0
  %v1210 = vadd.f32 %v1115, %v1159
  %v1211 = vadd.f32 %v1116, %v1161
  %v1212 = vadd.f32 %v1117, %v1202
  %v1213 = vadd.f32 %v1118, %v1204
  %v1214 = vadd.f32 %v1119, %v1163
  %v1215 = vadd.f32 %v1120, %v1165
  %v1216 = vadd.f32 %v1121, %v1206
  %v1217 = vadd.f32 %v1122, %v1208
  %v1218 = vxor.u32 %v1210, 2147483648
  %v1219 = vxor.u32 %v1211, 2147483648
  %v1220 = vxor.u32 %v1212, 2147483648
  %v1221 = vxor.u32 %v1214, 2147483648
  %v1222 = vxor.u32 %v1215, 2147483648
  %v1223 = vxor.u32 %v1216, 2147483648
  %v1224 = vmul.f32 %v1218, 1.442695
  %v1225 = vpow.pop %v1224
  %v1226 = vmul.f32 %v1219, 1.442695
  %v1227 = vpow.pop %v1226
  %v1228 = vmul.f32 %v1220, 1.442695
  %v1229 = vpow.pop %v1228
  %v1230 = vmul.f32 %v1221, 1.442695
  %v1231 = vpow.pop %v1230
  %v1232 = vmul.f32 %v1222, 1.442695
  %v1233 = vpow.pop %v1232
  %v1234 = vmul.f32 %v1223, 1.442695
  %v1235 = vpow.pop %v1234
  %v1236 = vadd.f32 %v1225, 1.0
  %v1237 = vadd.f32 %v1227, 1.0
  %v1238 = vadd.f32 %v1229, 1.0
  %v1239 = vadd.f32 %v1231, 1.0
  %v1240 = vadd.f32 %v1233, 1.0
  %v1241 = vadd.f32 %v1235, 1.0
  %v1242 = vrcp.pop %v1236
  %v1243 = vmul.f32 1.0, %v1242
  %v1244 = vrcp.pop %v1237
  %v1245 = vmul.f32 1.0, %v1244
  %v1246 = vrcp.pop %v1238
  %v1247 = vmul.f32 1.0, %v1246
  %v1248 = vrcp.pop %v1239
  %v1249 = vmul.f32 1.0, %v1248
  %v1250 = vrcp.pop %v1240
  %v1251 = vmul.f32 1.0, %v1250
  %v1252 = vrcp.pop %v1241
  %v1253 = vmul.f32 1.0, %v1252
  %v1254 = vtanh.pop %v1213
  %v1255 = vtanh.pop %v1217
  %v1256 = vmul.f32 %v1245, %v1106
  %v1257 = vmul.f32 %v1251, %v1107
  %v1258 = vmul.f32 %v1243, %v1254
  %v1259 = vmul.f32 %v1249, %v1255
  %v1260 = vadd.f32 %v1256, %v1258
  %v1261 = vadd.f32 %v1257, %v1259
  %v1262 = vtanh.pop %v1260
  %v1263 = vtanh.pop %v1261
  %v1264 = vmul.f32 %v1247, %v1262
  %v1265 = vmul.f32 %v1253, %v1263
  %s1266 = smul.u32 6, 4
  %s1267 = smul.addr %s1266, 8
  %s1268 = scalar_lea.vmem [#allocation2], %s1267
  %v1269 = vld [vmem:[%s1268] sm:$0xff]
  %v1270 = vld [vmem:[%s1268 + $0x8] sm:$0xff]
  %v1271 = vld [vmem:[%s1268 + $0x10] sm:$0xff]
  %v1272 = vld [vmem:[%s1268 + $0x18] sm:$0xff]
  %v1273 = vld [vmem:[%s1268 + $0x20] sm:$0xff]
  %v1274 = vld [vmem:[%s1268 + $0x28] sm:$0xff]
  %v1275 = vld [vmem:[%s1268 + $0x30] sm:$0xff]
  %v1276 = vld [vmem:[%s1268 + $0x38] sm:$0xff]
  %v1277 = vpack.c.bf16 %v1265, %v1264
  %1278 = vmatprep.subr.bf16.mxu0 %v781
  %1279 = vmatpush1.bf16.msra.mxu0 %v780
  %1280 = vmatprep.subr.bf16.mxu0 %v777
  %1281 = vmatpush1.bf16.msra.mxu0 %v776
  %1282 = vmatprep.subr.bf16.mxu0 %v773
  %1283 = vmatpush1.bf16.msra.mxu0 %v772
  %1284 = vmatprep.subr.bf16.mxu0 %v769
  %1285 = vmatpush1.bf16.msra.mxu0 %v768
  %1286 = vmatprep.subr.bf16.mxu0 %v765
  %1287 = vmatpush1.bf16.msra.mxu0 %v764
  %1288 = vmatprep.subr.bf16.mxu0 %v761
  %1289 = vmatpush1.bf16.msra.mxu0 %v760
  %1290 = vmatprep.subr.bf16.mxu0 %v757
  %1291 = vmatpush1.bf16.msra.mxu0 %v756
  %1292 = vmatprep.subr.bf16.mxu0 %v753
  %1293 = vmatpush1.bf16.msra.mxu0 %v752
  %1294 = vmatprep.subr.bf16.mxu0 0
  %1295 = vmatpush2.bf16.msra.mxu0 0
  %1296 = vmatprep.subr.bf16.mxu0 0
  %1297 = vmatpush2.bf16.msra.mxu0 0
  %1298 = vmatprep.subr.bf16.mxu0 0
  %1299 = vmatpush2.bf16.msra.mxu0 0
  %1300 = vmatprep.subr.bf16.mxu0 0
  %1301 = vmatpush2.bf16.msra.mxu0 0
  %1302 = vmatprep.subr.bf16.mxu0 0
  %1303 = vmatpush2.bf16.msra.mxu0 0
  %1304 = vmatprep.subr.bf16.mxu0 0
  %1305 = vmatpush2.bf16.msra.mxu0 0
  %1306 = vmatprep.subr.bf16.mxu0 0
  %1307 = vmatpush2.bf16.msra.mxu0 0
  %1308 = vmatprep.subr.bf16.mxu0 0
  %1309 = vmatpush2.bf16.msra.mxu0 0
  %1310 = vmatprep.mubr.bf16.mxu0 0
  %1311 = vmatmul.mubr.bf16.gmra.mxu0 %v1277
  %v1312 = vpop.f32.mrf.mxu0
  %v1313 = vadd.f32 0.0, %v1312
  %v1314 = vpop.f32.mrf.mxu0
  %v1315 = vadd.f32 0.0, %v1314
  %v1316 = vpop.f32.mrf.mxu0
  %v1317 = vadd.f32 0.0, %v1316
  %v1318 = vpop.f32.mrf.mxu0
  %v1319 = vadd.f32 0.0, %v1318
  %1320 = vdwg.mxu0
  %1321 = vmatprep.subr.bf16.mxu0 %v783
  %1322 = vmatpush1.bf16.msra.mxu0 %v782
  %1323 = vmatprep.subr.bf16.mxu0 %v779
  %1324 = vmatpush1.bf16.msra.mxu0 %v778
  %1325 = vmatprep.subr.bf16.mxu0 %v775
  %1326 = vmatpush1.bf16.msra.mxu0 %v774
  %1327 = vmatprep.subr.bf16.mxu0 %v771
  %1328 = vmatpush1.bf16.msra.mxu0 %v770
  %1329 = vmatprep.subr.bf16.mxu0 %v767
  %1330 = vmatpush1.bf16.msra.mxu0 %v766
  %1331 = vmatprep.subr.bf16.mxu0 %v763
  %1332 = vmatpush1.bf16.msra.mxu0 %v762
  %1333 = vmatprep.subr.bf16.mxu0 %v759
  %1334 = vmatpush1.bf16.msra.mxu0 %v758
  %1335 = vmatprep.subr.bf16.mxu0 %v755
  %1336 = vmatpush1.bf16.msra.mxu0 %v754
  %1337 = vmatprep.subr.bf16.mxu0 0
  %1338 = vmatpush2.bf16.msra.mxu0 0
  %1339 = vmatprep.subr.bf16.mxu0 0
  %1340 = vmatpush2.bf16.msra.mxu0 0
  %1341 = vmatprep.subr.bf16.mxu0 0
  %1342 = vmatpush2.bf16.msra.mxu0 0
  %1343 = vmatprep.subr.bf16.mxu0 0
  %1344 = vmatpush2.bf16.msra.mxu0 0
  %1345 = vmatprep.subr.bf16.mxu0 0
  %1346 = vmatpush2.bf16.msra.mxu0 0
  %1347 = vmatprep.subr.bf16.mxu0 0
  %1348 = vmatpush2.bf16.msra.mxu0 0
  %1349 = vmatprep.subr.bf16.mxu0 0
  %1350 = vmatpush2.bf16.msra.mxu0 0
  %1351 = vmatprep.subr.bf16.mxu0 0
  %1352 = vmatpush2.bf16.msra.mxu0 0
  %1353 = vmatprep.mubr.bf16.mxu0 0
  %1354 = vmatmul.mubr.bf16.gmra.mxu0 %v1277
  %v1355 = vpop.f32.mrf.mxu0
  %v1356 = vadd.f32 0.0, %v1355
  %v1357 = vpop.f32.mrf.mxu0
  %v1358 = vadd.f32 0.0, %v1357
  %v1359 = vpop.f32.mrf.mxu0
  %v1360 = vadd.f32 0.0, %v1359
  %v1361 = vpop.f32.mrf.mxu0
  %v1362 = vadd.f32 0.0, %v1361
  %1363 = vdwg.mxu0
  %v1364 = vadd.f32 %v1269, %v1313
  %v1365 = vadd.f32 %v1270, %v1315
  %v1366 = vadd.f32 %v1271, %v1356
  %v1367 = vadd.f32 %v1272, %v1358
  %v1368 = vadd.f32 %v1273, %v1317
  %v1369 = vadd.f32 %v1274, %v1319
  %v1370 = vadd.f32 %v1275, %v1360
  %v1371 = vadd.f32 %v1276, %v1362
  %v1372 = vxor.u32 %v1364, 2147483648
  %v1373 = vxor.u32 %v1365, 2147483648
  %v1374 = vxor.u32 %v1366, 2147483648
  %v1375 = vxor.u32 %v1368, 2147483648
  %v1376 = vxor.u32 %v1369, 2147483648
  %v1377 = vxor.u32 %v1370, 2147483648
  %v1378 = vmul.f32 %v1372, 1.442695
  %v1379 = vpow.pop %v1378
  %v1380 = vmul.f32 %v1373, 1.442695
  %v1381 = vpow.pop %v1380
  %v1382 = vmul.f32 %v1374, 1.442695
  %v1383 = vpow.pop %v1382
  %v1384 = vmul.f32 %v1375, 1.442695
  %v1385 = vpow.pop %v1384
  %v1386 = vmul.f32 %v1376, 1.442695
  %v1387 = vpow.pop %v1386
  %v1388 = vmul.f32 %v1377, 1.442695
  %v1389 = vpow.pop %v1388
  %v1390 = vadd.f32 %v1379, 1.0
  %v1391 = vadd.f32 %v1381, 1.0
  %v1392 = vadd.f32 %v1383, 1.0
  %v1393 = vadd.f32 %v1385, 1.0
  %v1394 = vadd.f32 %v1387, 1.0
  %v1395 = vadd.f32 %v1389, 1.0
  %v1396 = vrcp.pop %v1390
  %v1397 = vmul.f32 1.0, %v1396
  %v1398 = vrcp.pop %v1391
  %v1399 = vmul.f32 1.0, %v1398
  %v1400 = vrcp.pop %v1392
  %v1401 = vmul.f32 1.0, %v1400
  %v1402 = vrcp.pop %v1393
  %v1403 = vmul.f32 1.0, %v1402
  %v1404 = vrcp.pop %v1394
  %v1405 = vmul.f32 1.0, %v1404
  %v1406 = vrcp.pop %v1395
  %v1407 = vmul.f32 1.0, %v1406
  %v1408 = vtanh.pop %v1367
  %v1409 = vtanh.pop %v1371
  %v1410 = vmul.f32 %v1399, %v1260
  %v1411 = vmul.f32 %v1405, %v1261
  %v1412 = vmul.f32 %v1397, %v1408
  %v1413 = vmul.f32 %v1403, %v1409
  %v1414 = vadd.f32 %v1410, %v1412
  %v1415 = vadd.f32 %v1411, %v1413
  %v1416 = vtanh.pop %v1414
  %v1417 = vtanh.pop %v1415
  %v1418 = vmul.f32 %v1401, %v1416
  %v1419 = vmul.f32 %v1407, %v1417
  %s1420 = smul.u32 8, 4
  %s1421 = smul.addr %s1420, 8
  %s1422 = scalar_lea.vmem [#allocation2], %s1421
  %v1423 = vld [vmem:[%s1422] sm:$0xff]
  %v1424 = vld [vmem:[%s1422 + $0x8] sm:$0xff]
  %v1425 = vld [vmem:[%s1422 + $0x10] sm:$0xff]
  %v1426 = vld [vmem:[%s1422 + $0x18] sm:$0xff]
  %v1427 = vld [vmem:[%s1422 + $0x20] sm:$0xff]
  %v1428 = vld [vmem:[%s1422 + $0x28] sm:$0xff]
  %v1429 = vld [vmem:[%s1422 + $0x30] sm:$0xff]
  %v1430 = vld [vmem:[%s1422 + $0x38] sm:$0xff]
  %v1431 = vpack.c.bf16 %v1419, %v1418
  %1432 = vmatprep.subr.bf16.mxu0 %v781
  %1433 = vmatpush1.bf16.msra.mxu0 %v780
  %1434 = vmatprep.subr.bf16.mxu0 %v777
  %1435 = vmatpush1.bf16.msra.mxu0 %v776
  %1436 = vmatprep.subr.bf16.mxu0 %v773
  %1437 = vmatpush1.bf16.msra.mxu0 %v772
  %1438 = vmatprep.subr.bf16.mxu0 %v769
  %1439 = vmatpush1.bf16.msra.mxu0 %v768
  %1440 = vmatprep.subr.bf16.mxu0 %v765
  %1441 = vmatpush1.bf16.msra.mxu0 %v764
  %1442 = vmatprep.subr.bf16.mxu0 %v761
  %1443 = vmatpush1.bf16.msra.mxu0 %v760
  %1444 = vmatprep.subr.bf16.mxu0 %v757
  %1445 = vmatpush1.bf16.msra.mxu0 %v756
  %1446 = vmatprep.subr.bf16.mxu0 %v753
  %1447 = vmatpush1.bf16.msra.mxu0 %v752
  %1448 = vmatprep.subr.bf16.mxu0 0
  %1449 = vmatpush2.bf16.msra.mxu0 0
  %1450 = vmatprep.subr.bf16.mxu0 0
  %1451 = vmatpush2.bf16.msra.mxu0 0
  %1452 = vmatprep.subr.bf16.mxu0 0
  %1453 = vmatpush2.bf16.msra.mxu0 0
  %1454 = vmatprep.subr.bf16.mxu0 0
  %1455 = vmatpush2.bf16.msra.mxu0 0
  %1456 = vmatprep.subr.bf16.mxu0 0
  %1457 = vmatpush2.bf16.msra.mxu0 0
  %1458 = vmatprep.subr.bf16.mxu0 0
  %1459 = vmatpush2.bf16.msra.mxu0 0
  %1460 = vmatprep.subr.bf16.mxu0 0
  %1461 = vmatpush2.bf16.msra.mxu0 0
  %1462 = vmatprep.subr.bf16.mxu0 0
  %1463 = vmatpush2.bf16.msra.mxu0 0
  %1464 = vmatprep.mubr.bf16.mxu0 0
  %1465 = vmatmul.mubr.bf16.gmra.mxu0 %v1431
  %v1466 = vpop.f32.mrf.mxu0
  %v1467 = vadd.f32 0.0, %v1466
  %v1468 = vpop.f32.mrf.mxu0
  %v1469 = vadd.f32 0.0, %v1468
  %v1470 = vpop.f32.mrf.mxu0
  %v1471 = vadd.f32 0.0, %v1470
  %v1472 = vpop.f32.mrf.mxu0
  %v1473 = vadd.f32 0.0, %v1472
  %1474 = vdwg.mxu0
  %1475 = vmatprep.subr.bf16.mxu0 %v783
  %1476 = vmatpush1.bf16.msra.mxu0 %v782
  %1477 = vmatprep.subr.bf16.mxu0 %v779
  %1478 = vmatpush1.bf16.msra.mxu0 %v778
  %1479 = vmatprep.subr.bf16.mxu0 %v775
  %1480 = vmatpush1.bf16.msra.mxu0 %v774
  %1481 = vmatprep.subr.bf16.mxu0 %v771
  %1482 = vmatpush1.bf16.msra.mxu0 %v770
  %1483 = vmatprep.subr.bf16.mxu0 %v767
  %1484 = vmatpush1.bf16.msra.mxu0 %v766
  %1485 = vmatprep.subr.bf16.mxu0 %v763
  %1486 = vmatpush1.bf16.msra.mxu0 %v762
  %1487 = vmatprep.subr.bf16.mxu0 %v759
  %1488 = vmatpush1.bf16.msra.mxu0 %v758
  %1489 = vmatprep.subr.bf16.mxu0 %v755
  %1490 = vmatpush1.bf16.msra.mxu0 %v754
  %1491 = vmatprep.subr.bf16.mxu0 0
  %1492 = vmatpush2.bf16.msra.mxu0 0
  %1493 = vmatprep.subr.bf16.mxu0 0
  %1494 = vmatpush2.bf16.msra.mxu0 0
  %1495 = vmatprep.subr.bf16.mxu0 0
  %1496 = vmatpush2.bf16.msra.mxu0 0
  %1497 = vmatprep.subr.bf16.mxu0 0
  %1498 = vmatpush2.bf16.msra.mxu0 0
  %1499 = vmatprep.subr.bf16.mxu0 0
  %1500 = vmatpush2.bf16.msra.mxu0 0
  %1501 = vmatprep.subr.bf16.mxu0 0
  %1502 = vmatpush2.bf16.msra.mxu0 0
  %1503 = vmatprep.subr.bf16.mxu0 0
  %1504 = vmatpush2.bf16.msra.mxu0 0
  %1505 = vmatprep.subr.bf16.mxu0 0
  %1506 = vmatpush2.bf16.msra.mxu0 0
  %1507 = vmatprep.mubr.bf16.mxu0 0
  %1508 = vmatmul.mubr.bf16.gmra.mxu0 %v1431
  %v1509 = vpop.f32.mrf.mxu0
  %v1510 = vadd.f32 0.0, %v1509
  %v1511 = vpop.f32.mrf.mxu0
  %v1512 = vadd.f32 0.0, %v1511
  %v1513 = vpop.f32.mrf.mxu0
  %v1514 = vadd.f32 0.0, %v1513
  %v1515 = vpop.f32.mrf.mxu0
  %v1516 = vadd.f32 0.0, %v1515
  %1517 = vdwg.mxu0
  %v1518 = vadd.f32 %v1423, %v1467
  %v1519 = vadd.f32 %v1424, %v1469
  %v1520 = vadd.f32 %v1425, %v1510
  %v1521 = vadd.f32 %v1426, %v1512
  %v1522 = vadd.f32 %v1427, %v1471
  %v1523 = vadd.f32 %v1428, %v1473
  %v1524 = vadd.f32 %v1429, %v1514
  %v1525 = vadd.f32 %v1430, %v1516
  %v1526 = vxor.u32 %v1518, 2147483648
  %v1527 = vxor.u32 %v1519, 2147483648
  %v1528 = vxor.u32 %v1520, 2147483648
  %v1529 = vxor.u32 %v1522, 2147483648
  %v1530 = vxor.u32 %v1523, 2147483648
  %v1531 = vxor.u32 %v1524, 2147483648
  %v1532 = vmul.f32 %v1526, 1.442695
  %v1533 = vpow.pop %v1532
  %v1534 = vmul.f32 %v1527, 1.442695
  %v1535 = vpow.pop %v1534
  %v1536 = vmul.f32 %v1528, 1.442695
  %v1537 = vpow.pop %v1536
  %v1538 = vmul.f32 %v1529, 1.442695
  %v1539 = vpow.pop %v1538
  %v1540 = vmul.f32 %v1530, 1.442695
  %v1541 = vpow.pop %v1540
  %v1542 = vmul.f32 %v1531, 1.442695
  %v1543 = vpow.pop %v1542
  %v1544 = vadd.f32 %v1533, 1.0
  %v1545 = vadd.f32 %v1535, 1.0
  %v1546 = vadd.f32 %v1537, 1.0
  %v1547 = vadd.f32 %v1539, 1.0
  %v1548 = vadd.f32 %v1541, 1.0
  %v1549 = vadd.f32 %v1543, 1.0
  %v1550 = vrcp.pop %v1544
  %v1551 = vmul.f32 1.0, %v1550
  %v1552 = vrcp.pop %v1545
  %v1553 = vmul.f32 1.0, %v1552
  %v1554 = vrcp.pop %v1546
  %v1555 = vmul.f32 1.0, %v1554
  %v1556 = vrcp.pop %v1547
  %v1557 = vmul.f32 1.0, %v1556
  %v1558 = vrcp.pop %v1548
  %v1559 = vmul.f32 1.0, %v1558
  %v1560 = vrcp.pop %v1549
  %v1561 = vmul.f32 1.0, %v1560
  %v1562 = vtanh.pop %v1521
  %v1563 = vtanh.pop %v1525
  %v1564 = vmul.f32 %v1553, %v1414
  %v1565 = vmul.f32 %v1559, %v1415
  %v1566 = vmul.f32 %v1551, %v1562
  %v1567 = vmul.f32 %v1557, %v1563
  %v1568 = vadd.f32 %v1564, %v1566
  %v1569 = vadd.f32 %v1565, %v1567
  %v1570 = vtanh.pop %v1568
  %v1571 = vtanh.pop %v1569
  %v1572 = vmul.f32 %v1555, %v1570
  %v1573 = vmul.f32 %v1561, %v1571
  %s1574 = smul.u32 10, 4
  %s1575 = smul.addr %s1574, 8
  %s1576 = scalar_lea.vmem [#allocation2], %s1575
  %v1577 = vld [vmem:[%s1576] sm:$0xff]
  %v1578 = vld [vmem:[%s1576 + $0x8] sm:$0xff]
  %v1579 = vld [vmem:[%s1576 + $0x10] sm:$0xff]
  %v1580 = vld [vmem:[%s1576 + $0x18] sm:$0xff]
  %v1581 = vld [vmem:[%s1576 + $0x20] sm:$0xff]
  %v1582 = vld [vmem:[%s1576 + $0x28] sm:$0xff]
  %v1583 = vld [vmem:[%s1576 + $0x30] sm:$0xff]
  %v1584 = vld [vmem:[%s1576 + $0x38] sm:$0xff]
  %v1585 = vpack.c.bf16 %v1573, %v1572
  %1586 = vmatprep.subr.bf16.mxu0 %v781
  %1587 = vmatpush1.bf16.msra.mxu0 %v780
  %1588 = vmatprep.subr.bf16.mxu0 %v777
  %1589 = vmatpush1.bf16.msra.mxu0 %v776
  %1590 = vmatprep.subr.bf16.mxu0 %v773
  %1591 = vmatpush1.bf16.msra.mxu0 %v772
  %1592 = vmatprep.subr.bf16.mxu0 %v769
  %1593 = vmatpush1.bf16.msra.mxu0 %v768
  %1594 = vmatprep.subr.bf16.mxu0 %v765
  %1595 = vmatpush1.bf16.msra.mxu0 %v764
  %1596 = vmatprep.subr.bf16.mxu0 %v761
  %1597 = vmatpush1.bf16.msra.mxu0 %v760
  %1598 = vmatprep.subr.bf16.mxu0 %v757
  %1599 = vmatpush1.bf16.msra.mxu0 %v756
  %1600 = vmatprep.subr.bf16.mxu0 %v753
  %1601 = vmatpush1.bf16.msra.mxu0 %v752
  %1602 = vmatprep.subr.bf16.mxu0 0
  %1603 = vmatpush2.bf16.msra.mxu0 0
  %1604 = vmatprep.subr.bf16.mxu0 0
  %1605 = vmatpush2.bf16.msra.mxu0 0
  %1606 = vmatprep.subr.bf16.mxu0 0
  %1607 = vmatpush2.bf16.msra.mxu0 0
  %1608 = vmatprep.subr.bf16.mxu0 0
  %1609 = vmatpush2.bf16.msra.mxu0 0
  %1610 = vmatprep.subr.bf16.mxu0 0
  %1611 = vmatpush2.bf16.msra.mxu0 0
  %1612 = vmatprep.subr.bf16.mxu0 0
  %1613 = vmatpush2.bf16.msra.mxu0 0
  %1614 = vmatprep.subr.bf16.mxu0 0
  %1615 = vmatpush2.bf16.msra.mxu0 0
  %1616 = vmatprep.subr.bf16.mxu0 0
  %1617 = vmatpush2.bf16.msra.mxu0 0
  %1618 = vmatprep.mubr.bf16.mxu0 0
  %1619 = vmatmul.mubr.bf16.gmra.mxu0 %v1585
  %v1620 = vpop.f32.mrf.mxu0
  %v1621 = vadd.f32 0.0, %v1620
  %v1622 = vpop.f32.mrf.mxu0
  %v1623 = vadd.f32 0.0, %v1622
  %v1624 = vpop.f32.mrf.mxu0
  %v1625 = vadd.f32 0.0, %v1624
  %v1626 = vpop.f32.mrf.mxu0
  %v1627 = vadd.f32 0.0, %v1626
  %1628 = vdwg.mxu0
  %1629 = vmatprep.subr.bf16.mxu0 %v783
  %1630 = vmatpush1.bf16.msra.mxu0 %v782
  %1631 = vmatprep.subr.bf16.mxu0 %v779
  %1632 = vmatpush1.bf16.msra.mxu0 %v778
  %1633 = vmatprep.subr.bf16.mxu0 %v775
  %1634 = vmatpush1.bf16.msra.mxu0 %v774
  %1635 = vmatprep.subr.bf16.mxu0 %v771
  %1636 = vmatpush1.bf16.msra.mxu0 %v770
  %1637 = vmatprep.subr.bf16.mxu0 %v767
  %1638 = vmatpush1.bf16.msra.mxu0 %v766
  %1639 = vmatprep.subr.bf16.mxu0 %v763
  %1640 = vmatpush1.bf16.msra.mxu0 %v762
  %1641 = vmatprep.subr.bf16.mxu0 %v759
  %1642 = vmatpush1.bf16.msra.mxu0 %v758
  %1643 = vmatprep.subr.bf16.mxu0 %v755
  %1644 = vmatpush1.bf16.msra.mxu0 %v754
  %1645 = vmatprep.subr.bf16.mxu0 0
  %1646 = vmatpush2.bf16.msra.mxu0 0
  %1647 = vmatprep.subr.bf16.mxu0 0
  %1648 = vmatpush2.bf16.msra.mxu0 0
  %1649 = vmatprep.subr.bf16.mxu0 0
  %1650 = vmatpush2.bf16.msra.mxu0 0
  %1651 = vmatprep.subr.bf16.mxu0 0
  %1652 = vmatpush2.bf16.msra.mxu0 0
  %1653 = vmatprep.subr.bf16.mxu0 0
  %1654 = vmatpush2.bf16.msra.mxu0 0
  %1655 = vmatprep.subr.bf16.mxu0 0
  %1656 = vmatpush2.bf16.msra.mxu0 0
  %1657 = vmatprep.subr.bf16.mxu0 0
  %1658 = vmatpush2.bf16.msra.mxu0 0
  %1659 = vmatprep.subr.bf16.mxu0 0
  %1660 = vmatpush2.bf16.msra.mxu0 0
  %1661 = vmatprep.mubr.bf16.mxu0 0
  %1662 = vmatmul.mubr.bf16.gmra.mxu0 %v1585
  %v1663 = vpop.f32.mrf.mxu0
  %v1664 = vadd.f32 0.0, %v1663
  %v1665 = vpop.f32.mrf.mxu0
  %v1666 = vadd.f32 0.0, %v1665
  %v1667 = vpop.f32.mrf.mxu0
  %v1668 = vadd.f32 0.0, %v1667
  %v1669 = vpop.f32.mrf.mxu0
  %v1670 = vadd.f32 0.0, %v1669
  %1671 = vdwg.mxu0
  %v1672 = vadd.f32 %v1577, %v1621
  %v1673 = vadd.f32 %v1578, %v1623
  %v1674 = vadd.f32 %v1579, %v1664
  %v1675 = vadd.f32 %v1580, %v1666
  %v1676 = vadd.f32 %v1581, %v1625
  %v1677 = vadd.f32 %v1582, %v1627
  %v1678 = vadd.f32 %v1583, %v1668
  %v1679 = vadd.f32 %v1584, %v1670
  %v1680 = vxor.u32 %v1672, 2147483648
  %v1681 = vxor.u32 %v1673, 2147483648
  %v1682 = vxor.u32 %v1674, 2147483648
  %v1683 = vxor.u32 %v1676, 2147483648
  %v1684 = vxor.u32 %v1677, 2147483648
  %v1685 = vxor.u32 %v1678, 2147483648
  %v1686 = vmul.f32 %v1680, 1.442695
  %v1687 = vpow.pop %v1686
  %v1688 = vmul.f32 %v1681, 1.442695
  %v1689 = vpow.pop %v1688
  %v1690 = vmul.f32 %v1682, 1.442695
  %v1691 = vpow.pop %v1690
  %v1692 = vmul.f32 %v1683, 1.442695
  %v1693 = vpow.pop %v1692
  %v1694 = vmul.f32 %v1684, 1.442695
  %v1695 = vpow.pop %v1694
  %v1696 = vmul.f32 %v1685, 1.442695
  %v1697 = vpow.pop %v1696
  %v1698 = vadd.f32 %v1687, 1.0
  %v1699 = vadd.f32 %v1689, 1.0
  %v1700 = vadd.f32 %v1691, 1.0
  %v1701 = vadd.f32 %v1693, 1.0
  %v1702 = vadd.f32 %v1695, 1.0
  %v1703 = vadd.f32 %v1697, 1.0
  %v1704 = vrcp.pop %v1698
  %v1705 = vmul.f32 1.0, %v1704
  %v1706 = vrcp.pop %v1699
  %v1707 = vmul.f32 1.0, %v1706
  %v1708 = vrcp.pop %v1700
  %v1709 = vmul.f32 1.0, %v1708
  %v1710 = vrcp.pop %v1701
  %v1711 = vmul.f32 1.0, %v1710
  %v1712 = vrcp.pop %v1702
  %v1713 = vmul.f32 1.0, %v1712
  %v1714 = vrcp.pop %v1703
  %v1715 = vmul.f32 1.0, %v1714
  %v1716 = vtanh.pop %v1675
  %v1717 = vtanh.pop %v1679
  %v1718 = vmul.f32 %v1707, %v1568
  %v1719 = vmul.f32 %v1713, %v1569
  %v1720 = vmul.f32 %v1705, %v1716
  %v1721 = vmul.f32 %v1711, %v1717
  %v1722 = vadd.f32 %v1718, %v1720
  %v1723 = vadd.f32 %v1719, %v1721
  %v1724 = vtanh.pop %v1722
  %v1725 = vtanh.pop %v1723
  %v1726 = vmul.f32 %v1709, %v1724
  %v1727 = vmul.f32 %v1715, %v1725
  %s1728 = smul.u32 12, 4
  %s1729 = smul.addr %s1728, 8
  %s1730 = scalar_lea.vmem [#allocation2], %s1729
  %v1731 = vld [vmem:[%s1730] sm:$0xff]
  %v1732 = vld [vmem:[%s1730 + $0x8] sm:$0xff]
  %v1733 = vld [vmem:[%s1730 + $0x10] sm:$0xff]
  %v1734 = vld [vmem:[%s1730 + $0x18] sm:$0xff]
  %v1735 = vld [vmem:[%s1730 + $0x20] sm:$0xff]
  %v1736 = vld [vmem:[%s1730 + $0x28] sm:$0xff]
  %v1737 = vld [vmem:[%s1730 + $0x30] sm:$0xff]
  %v1738 = vld [vmem:[%s1730 + $0x38] sm:$0xff]
  %v1739 = vpack.c.bf16 %v1727, %v1726
  %1740 = vmatprep.subr.bf16.mxu0 %v781
  %1741 = vmatpush1.bf16.msra.mxu0 %v780
  %1742 = vmatprep.subr.bf16.mxu0 %v777
  %1743 = vmatpush1.bf16.msra.mxu0 %v776
  %1744 = vmatprep.subr.bf16.mxu0 %v773
  %1745 = vmatpush1.bf16.msra.mxu0 %v772
  %1746 = vmatprep.subr.bf16.mxu0 %v769
  %1747 = vmatpush1.bf16.msra.mxu0 %v768
  %1748 = vmatprep.subr.bf16.mxu0 %v765
  %1749 = vmatpush1.bf16.msra.mxu0 %v764
  %1750 = vmatprep.subr.bf16.mxu0 %v761
  %1751 = vmatpush1.bf16.msra.mxu0 %v760
  %1752 = vmatprep.subr.bf16.mxu0 %v757
  %1753 = vmatpush1.bf16.msra.mxu0 %v756
  %1754 = vmatprep.subr.bf16.mxu0 %v753
  %1755 = vmatpush1.bf16.msra.mxu0 %v752
  %1756 = vmatprep.subr.bf16.mxu0 0
  %1757 = vmatpush2.bf16.msra.mxu0 0
  %1758 = vmatprep.subr.bf16.mxu0 0
  %1759 = vmatpush2.bf16.msra.mxu0 0
  %1760 = vmatprep.subr.bf16.mxu0 0
  %1761 = vmatpush2.bf16.msra.mxu0 0
  %1762 = vmatprep.subr.bf16.mxu0 0
  %1763 = vmatpush2.bf16.msra.mxu0 0
  %1764 = vmatprep.subr.bf16.mxu0 0
  %1765 = vmatpush2.bf16.msra.mxu0 0
  %1766 = vmatprep.subr.bf16.mxu0 0
  %1767 = vmatpush2.bf16.msra.mxu0 0
  %1768 = vmatprep.subr.bf16.mxu0 0
  %1769 = vmatpush2.bf16.msra.mxu0 0
  %1770 = vmatprep.subr.bf16.mxu0 0
  %1771 = vmatpush2.bf16.msra.mxu0 0
  %1772 = vmatprep.mubr.bf16.mxu0 0
  %1773 = vmatmul.mubr.bf16.gmra.mxu0 %v1739
  %v1774 = vpop.f32.mrf.mxu0
  %v1775 = vadd.f32 0.0, %v1774
  %v1776 = vpop.f32.mrf.mxu0
  %v1777 = vadd.f32 0.0, %v1776
  %v1778 = vpop.f32.mrf.mxu0
  %v1779 = vadd.f32 0.0, %v1778
  %v1780 = vpop.f32.mrf.mxu0
  %v1781 = vadd.f32 0.0, %v1780
  %1782 = vdwg.mxu0
  %1783 = vmatprep.subr.bf16.mxu0 %v783
  %1784 = vmatpush1.bf16.msra.mxu0 %v782
  %1785 = vmatprep.subr.bf16.mxu0 %v779
  %1786 = vmatpush1.bf16.msra.mxu0 %v778
  %1787 = vmatprep.subr.bf16.mxu0 %v775
  %1788 = vmatpush1.bf16.msra.mxu0 %v774
  %1789 = vmatprep.subr.bf16.mxu0 %v771
  %1790 = vmatpush1.bf16.msra.mxu0 %v770
  %1791 = vmatprep.subr.bf16.mxu0 %v767
  %1792 = vmatpush1.bf16.msra.mxu0 %v766
  %1793 = vmatprep.subr.bf16.mxu0 %v763
  %1794 = vmatpush1.bf16.msra.mxu0 %v762
  %1795 = vmatprep.subr.bf16.mxu0 %v759
  %1796 = vmatpush1.bf16.msra.mxu0 %v758
  %1797 = vmatprep.subr.bf16.mxu0 %v755
  %1798 = vmatpush1.bf16.msra.mxu0 %v754
  %1799 = vmatprep.subr.bf16.mxu0 0
  %1800 = vmatpush2.bf16.msra.mxu0 0
  %1801 = vmatprep.subr.bf16.mxu0 0
  %1802 = vmatpush2.bf16.msra.mxu0 0
  %1803 = vmatprep.subr.bf16.mxu0 0
  %1804 = vmatpush2.bf16.msra.mxu0 0
  %1805 = vmatprep.subr.bf16.mxu0 0
  %1806 = vmatpush2.bf16.msra.mxu0 0
  %1807 = vmatprep.subr.bf16.mxu0 0
  %1808 = vmatpush2.bf16.msra.mxu0 0
  %1809 = vmatprep.subr.bf16.mxu0 0
  %1810 = vmatpush2.bf16.msra.mxu0 0
  %1811 = vmatprep.subr.bf16.mxu0 0
  %1812 = vmatpush2.bf16.msra.mxu0 0
  %1813 = vmatprep.subr.bf16.mxu0 0
  %1814 = vmatpush2.bf16.msra.mxu0 0
  %1815 = vmatprep.mubr.bf16.mxu0 0
  %1816 = vmatmul.mubr.bf16.gmra.mxu0 %v1739
  %v1817 = vpop.f32.mrf.mxu0
  %v1818 = vadd.f32 0.0, %v1817
  %v1819 = vpop.f32.mrf.mxu0
  %v1820 = vadd.f32 0.0, %v1819
  %v1821 = vpop.f32.mrf.mxu0
  %v1822 = vadd.f32 0.0, %v1821
  %v1823 = vpop.f32.mrf.mxu0
  %v1824 = vadd.f32 0.0, %v1823
  %1825 = vdwg.mxu0
  %v1826 = vadd.f32 %v1731, %v1775
  %v1827 = vadd.f32 %v1732, %v1777
  %v1828 = vadd.f32 %v1733, %v1818
  %v1829 = vadd.f32 %v1734, %v1820
  %v1830 = vadd.f32 %v1735, %v1779
  %v1831 = vadd.f32 %v1736, %v1781
  %v1832 = vadd.f32 %v1737, %v1822
  %v1833 = vadd.f32 %v1738, %v1824
  %v1834 = vxor.u32 %v1826, 2147483648
  %v1835 = vxor.u32 %v1827, 2147483648
  %v1836 = vxor.u32 %v1828, 2147483648
  %v1837 = vxor.u32 %v1830, 2147483648
  %v1838 = vxor.u32 %v1831, 2147483648
  %v1839 = vxor.u32 %v1832, 2147483648
  %v1840 = vmul.f32 %v1834, 1.442695
  %v1841 = vpow.pop %v1840
  %v1842 = vmul.f32 %v1835, 1.442695
  %v1843 = vpow.pop %v1842
  %v1844 = vmul.f32 %v1836, 1.442695
  %v1845 = vpow.pop %v1844
  %v1846 = vmul.f32 %v1837, 1.442695
  %v1847 = vpow.pop %v1846
  %v1848 = vmul.f32 %v1838, 1.442695
  %v1849 = vpow.pop %v1848
  %v1850 = vmul.f32 %v1839, 1.442695
  %v1851 = vpow.pop %v1850
  %v1852 = vadd.f32 %v1841, 1.0
  %v1853 = vadd.f32 %v1843, 1.0
  %v1854 = vadd.f32 %v1845, 1.0
  %v1855 = vadd.f32 %v1847, 1.0
  %v1856 = vadd.f32 %v1849, 1.0
  %v1857 = vadd.f32 %v1851, 1.0
  %v1858 = vrcp.pop %v1852
  %v1859 = vmul.f32 1.0, %v1858
  %v1860 = vrcp.pop %v1853
  %v1861 = vmul.f32 1.0, %v1860
  %v1862 = vrcp.pop %v1854
  %v1863 = vmul.f32 1.0, %v1862
  %v1864 = vrcp.pop %v1855
  %v1865 = vmul.f32 1.0, %v1864
  %v1866 = vrcp.pop %v1856
  %v1867 = vmul.f32 1.0, %v1866
  %v1868 = vrcp.pop %v1857
  %v1869 = vmul.f32 1.0, %v1868
  %v1870 = vtanh.pop %v1829
  %v1871 = vtanh.pop %v1833
  %v1872 = vmul.f32 %v1861, %v1722
  %v1873 = vmul.f32 %v1867, %v1723
  %v1874 = vmul.f32 %v1859, %v1870
  %v1875 = vmul.f32 %v1865, %v1871
  %v1876 = vadd.f32 %v1872, %v1874
  %v1877 = vadd.f32 %v1873, %v1875
  %v1878 = vtanh.pop %v1876
  %v1879 = vtanh.pop %v1877
  %v1880 = vmul.f32 %v1863, %v1878
  %v1881 = vmul.f32 %v1869, %v1879
  %s1882 = smul.u32 14, 4
  %s1883 = smul.addr %s1882, 8
  %s1884 = scalar_lea.vmem [#allocation2], %s1883
  %v1885 = vld [vmem:[%s1884] sm:$0xff]
  %v1886 = vld [vmem:[%s1884 + $0x8] sm:$0xff]
  %v1887 = vld [vmem:[%s1884 + $0x10] sm:$0xff]
  %v1888 = vld [vmem:[%s1884 + $0x18] sm:$0xff]
  %v1889 = vld [vmem:[%s1884 + $0x20] sm:$0xff]
  %v1890 = vld [vmem:[%s1884 + $0x28] sm:$0xff]
  %v1891 = vld [vmem:[%s1884 + $0x30] sm:$0xff]
  %v1892 = vld [vmem:[%s1884 + $0x38] sm:$0xff]
  %v1893 = vpack.c.bf16 %v1881, %v1880
  %1894 = vmatprep.subr.bf16.mxu0 %v781
  %1895 = vmatpush1.bf16.msra.mxu0 %v780
  %1896 = vmatprep.subr.bf16.mxu0 %v777
  %1897 = vmatpush1.bf16.msra.mxu0 %v776
  %1898 = vmatprep.subr.bf16.mxu0 %v773
  %1899 = vmatpush1.bf16.msra.mxu0 %v772
  %1900 = vmatprep.subr.bf16.mxu0 %v769
  %1901 = vmatpush1.bf16.msra.mxu0 %v768
  %1902 = vmatprep.subr.bf16.mxu0 %v765
  %1903 = vmatpush1.bf16.msra.mxu0 %v764
  %1904 = vmatprep.subr.bf16.mxu0 %v761
  %1905 = vmatpush1.bf16.msra.mxu0 %v760
  %1906 = vmatprep.subr.bf16.mxu0 %v757
  %1907 = vmatpush1.bf16.msra.mxu0 %v756
  %1908 = vmatprep.subr.bf16.mxu0 %v753
  %1909 = vmatpush1.bf16.msra.mxu0 %v752
  %1910 = vmatprep.subr.bf16.mxu0 0
  %1911 = vmatpush2.bf16.msra.mxu0 0
  %1912 = vmatprep.subr.bf16.mxu0 0
  %1913 = vmatpush2.bf16.msra.mxu0 0
  %1914 = vmatprep.subr.bf16.mxu0 0
  %1915 = vmatpush2.bf16.msra.mxu0 0
  %1916 = vmatprep.subr.bf16.mxu0 0
  %1917 = vmatpush2.bf16.msra.mxu0 0
  %1918 = vmatprep.subr.bf16.mxu0 0
  %1919 = vmatpush2.bf16.msra.mxu0 0
  %1920 = vmatprep.subr.bf16.mxu0 0
  %1921 = vmatpush2.bf16.msra.mxu0 0
  %1922 = vmatprep.subr.bf16.mxu0 0
  %1923 = vmatpush2.bf16.msra.mxu0 0
  %1924 = vmatprep.subr.bf16.mxu0 0
  %1925 = vmatpush2.bf16.msra.mxu0 0
  %1926 = vmatprep.mubr.bf16.mxu0 0
  %1927 = vmatmul.mubr.bf16.gmra.mxu0 %v1893
  %v1928 = vpop.f32.mrf.mxu0
  %v1929 = vadd.f32 0.0, %v1928
  %v1930 = vpop.f32.mrf.mxu0
  %v1931 = vadd.f32 0.0, %v1930
  %v1932 = vpop.f32.mrf.mxu0
  %v1933 = vadd.f32 0.0, %v1932
  %v1934 = vpop.f32.mrf.mxu0
  %v1935 = vadd.f32 0.0, %v1934
  %1936 = vdwg.mxu0
  %1937 = vmatprep.subr.bf16.mxu0 %v783
  %1938 = vmatpush1.bf16.msra.mxu0 %v782
  %1939 = vmatprep.subr.bf16.mxu0 %v779
  %1940 = vmatpush1.bf16.msra.mxu0 %v778
  %1941 = vmatprep.subr.bf16.mxu0 %v775
  %1942 = vmatpush1.bf16.msra.mxu0 %v774
  %1943 = vmatprep.subr.bf16.mxu0 %v771
  %1944 = vmatpush1.bf16.msra.mxu0 %v770
  %1945 = vmatprep.subr.bf16.mxu0 %v767
  %1946 = vmatpush1.bf16.msra.mxu0 %v766
  %1947 = vmatprep.subr.bf16.mxu0 %v763
  %1948 = vmatpush1.bf16.msra.mxu0 %v762
  %1949 = vmatprep.subr.bf16.mxu0 %v759
  %1950 = vmatpush1.bf16.msra.mxu0 %v758
  %1951 = vmatprep.subr.bf16.mxu0 %v755
  %1952 = vmatpush1.bf16.msra.mxu0 %v754
  %1953 = vmatprep.subr.bf16.mxu0 0
  %1954 = vmatpush2.bf16.msra.mxu0 0
  %1955 = vmatprep.subr.bf16.mxu0 0
  %1956 = vmatpush2.bf16.msra.mxu0 0
  %1957 = vmatprep.subr.bf16.mxu0 0
  %1958 = vmatpush2.bf16.msra.mxu0 0
  %1959 = vmatprep.subr.bf16.mxu0 0
  %1960 = vmatpush2.bf16.msra.mxu0 0
  %1961 = vmatprep.subr.bf16.mxu0 0
  %1962 = vmatpush2.bf16.msra.mxu0 0
  %1963 = vmatprep.subr.bf16.mxu0 0
  %1964 = vmatpush2.bf16.msra.mxu0 0
  %1965 = vmatprep.subr.bf16.mxu0 0
  %1966 = vmatpush2.bf16.msra.mxu0 0
  %1967 = vmatprep.subr.bf16.mxu0 0
  %1968 = vmatpush2.bf16.msra.mxu0 0
  %1969 = vmatprep.mubr.bf16.mxu0 0
  %1970 = vmatmul.mubr.bf16.gmra.mxu0 %v1893
  %v1971 = vpop.f32.mrf.mxu0
  %v1972 = vadd.f32 0.0, %v1971
  %v1973 = vpop.f32.mrf.mxu0
  %v1974 = vadd.f32 0.0, %v1973
  %v1975 = vpop.f32.mrf.mxu0
  %v1976 = vadd.f32 0.0, %v1975
  %v1977 = vpop.f32.mrf.mxu0
  %v1978 = vadd.f32 0.0, %v1977
  %1979 = vdwg.mxu0
  %v1980 = vadd.f32 %v1885, %v1929
  %v1981 = vadd.f32 %v1886, %v1931
  %v1982 = vadd.f32 %v1887, %v1972
  %v1983 = vadd.f32 %v1888, %v1974
  %v1984 = vadd.f32 %v1889, %v1933
  %v1985 = vadd.f32 %v1890, %v1935
  %v1986 = vadd.f32 %v1891, %v1976
  %v1987 = vadd.f32 %v1892, %v1978
  %v1988 = vxor.u32 %v1980, 2147483648
  %v1989 = vxor.u32 %v1981, 2147483648
  %v1990 = vxor.u32 %v1982, 2147483648
  %v1991 = vxor.u32 %v1984, 2147483648
  %v1992 = vxor.u32 %v1985, 2147483648
  %v1993 = vxor.u32 %v1986, 2147483648
  %v1994 = vmul.f32 %v1988, 1.442695
  %v1995 = vpow.pop %v1994
  %v1996 = vmul.f32 %v1989, 1.442695
  %v1997 = vpow.pop %v1996
  %v1998 = vmul.f32 %v1990, 1.442695
  %v1999 = vpow.pop %v1998
  %v2000 = vmul.f32 %v1991, 1.442695
  %v2001 = vpow.pop %v2000
  %v2002 = vmul.f32 %v1992, 1.442695
  %v2003 = vpow.pop %v2002
  %v2004 = vmul.f32 %v1993, 1.442695
  %v2005 = vpow.pop %v2004
  %v2006 = vadd.f32 %v1995, 1.0
  %v2007 = vadd.f32 %v1997, 1.0
  %v2008 = vadd.f32 %v1999, 1.0
  %v2009 = vadd.f32 %v2001, 1.0
  %v2010 = vadd.f32 %v2003, 1.0
  %v2011 = vadd.f32 %v2005, 1.0
  %v2012 = vrcp.pop %v2006
  %v2013 = vmul.f32 1.0, %v2012
  %v2014 = vrcp.pop %v2007
  %v2015 = vmul.f32 1.0, %v2014
  %v2016 = vrcp.pop %v2008
  %v2017 = vmul.f32 1.0, %v2016
  %v2018 = vrcp.pop %v2009
  %v2019 = vmul.f32 1.0, %v2018
  %v2020 = vrcp.pop %v2010
  %v2021 = vmul.f32 1.0, %v2020
  %v2022 = vrcp.pop %v2011
  %v2023 = vmul.f32 1.0, %v2022
  %v2024 = vtanh.pop %v1983
  %v2025 = vtanh.pop %v1987
  %v2026 = vmul.f32 %v2015, %v1876
  %v2027 = vmul.f32 %v2021, %v1877
  %v2028 = vmul.f32 %v2013, %v2024
  %v2029 = vmul.f32 %v2019, %v2025
  %v2030 = vadd.f32 %v2026, %v2028
  %v2031 = vadd.f32 %v2027, %v2029
  %v2032 = vtanh.pop %v2030
  %v2033 = vtanh.pop %v2031
  %v2034 = vmul.f32 %v2017, %v2032
  %v2035 = vmul.f32 %v2023, %v2033
  %2036 = vst [vmem:[#allocation3] sm:$0xff] %v2034
  %2037 = vst [vmem:[#allocation3 + $0x8] sm:$0xff] %v2035
  %2038 = vst [vmem:[#allocation4] sm:$0xff] %v2030
  %2039 = vst [vmem:[#allocation4 + $0x8] sm:$0xff] %v2031
  // Predicated region
  $region90: #{candle_lstm_forward.1} parent=0 // pred_check
    %p2040 = pneg %p20
  $region91: #{candle_lstm_forward.1} parent=0 // pred_check_branch
    %2042 = sbr.rel (%p2040) target = $region93
  $region92: #{candle_lstm_forward.1} parent=0 // pred_region
    %v2043 = vld [vmem:[%s4] sm:$0xff]
    %v2044 = vld [vmem:[%s4 + $0x8] sm:$0xff]
    %v2045 = vld [vmem:[%s4 + $0x10] sm:$0xff]
    %v2046 = vld [vmem:[%s4 + $0x18] sm:$0xff]
    %v2047 = vld [vmem:[%s4 + $0x20] sm:$0xff]
    %v2048 = vld [vmem:[%s4 + $0x28] sm:$0xff]
    %v2049 = vld [vmem:[%s4 + $0x30] sm:$0xff]
    %v2050 = vld [vmem:[%s4 + $0x38] sm:$0xff]
    %v2051 = vld [vmem:[%s4 + $0x40] sm:$0xff]
    %v2052 = vld [vmem:[%s4 + $0x48] sm:$0xff]
    %v2053 = vld [vmem:[%s4 + $0x50] sm:$0xff]
    %v2054 = vld [vmem:[%s4 + $0x58] sm:$0xff]
    %v2055 = vld [vmem:[%s4 + $0x60] sm:$0xff]
    %v2056 = vld [vmem:[%s4 + $0x68] sm:$0xff]
    %v2057 = vld [vmem:[%s4 + $0x70] sm:$0xff]
    %v2058 = vld [vmem:[%s4 + $0x78] sm:$0xff]
    %v2059 = vld [vmem:[%s5] sm:$0x1]
    %v2061 = vlaneseq
    %v2062 = vshrl.u32 %v2061, 7
    %v2063 = vsub.s32 0, %v2062
    %v2064 = vrot.slane %v2059, %v2063
    %2066 = vmatprep.subr.mxu0 0.0
    %2067 = vmatpush1.msra.mxu0 %v2058
    %2068 = vmatprep.subr.mxu0 0.0
    %2069 = vmatpush1.msra.mxu0 %v2057
    %2070 = vmatprep.subr.mxu0 0.0
    %2071 = vmatpush1.msra.mxu0 %v2056
    %2072 = vmatprep.subr.mxu0 0.0
    %2073 = vmatpush1.msra.mxu0 %v2055
    %2074 = vmatprep.subr.mxu0 0.0
    %2075 = vmatpush1.msra.mxu0 %v2054
    %2076 = vmatprep.subr.mxu0 0.0
    %2077 = vmatpush1.msra.mxu0 %v2053
    %2078 = vmatprep.subr.mxu0 0.0
    %2079 = vmatpush1.msra.mxu0 %v2052
    %2080 = vmatprep.subr.mxu0 0.0
    %2081 = vmatpush1.msra.mxu0 %v2051
    %2082 = vmatprep.subr.mxu0 0.0
    %2083 = vmatpush1.msra.mxu0 %v2050
    %2084 = vmatprep.subr.mxu0 0.0
    %2085 = vmatpush1.msra.mxu0 %v2049
    %2086 = vmatprep.subr.mxu0 0.0
    %2087 = vmatpush1.msra.mxu0 %v2048
    %2088 = vmatprep.subr.mxu0 0.0
    %2089 = vmatpush1.msra.mxu0 %v2047
    %2090 = vmatprep.subr.mxu0 0.0
    %2091 = vmatpush1.msra.mxu0 %v2046
    %2092 = vmatprep.subr.mxu0 0.0
    %2093 = vmatpush1.msra.mxu0 %v2045
    %2094 = vmatprep.subr.mxu0 0.0
    %2095 = vmatpush1.msra.mxu0 %v2044
    %2096 = vmatprep.subr.mxu0 0.0
    %2097 = vmatpush1.msra.mxu0 %v2043
    %2098 = vmatprep.subr.mxu0 0.0
    %2099 = vmatpush2.msra.mxu0 0.0
    %2100 = vmatprep.subr.mxu0 0.0
    %2101 = vmatpush2.msra.mxu0 0.0
    %2102 = vmatprep.subr.mxu0 0.0
    %2103 = vmatpush2.msra.mxu0 0.0
    %2104 = vmatprep.subr.mxu0 0.0
    %2105 = vmatpush2.msra.mxu0 0.0
    %2106 = vmatprep.subr.mxu0 0.0
    %2107 = vmatpush2.msra.mxu0 0.0
    %2108 = vmatprep.subr.mxu0 0.0
    %2109 = vmatpush2.msra.mxu0 0.0
    %2110 = vmatprep.subr.mxu0 0.0
    %2111 = vmatpush2.msra.mxu0 0.0
    %2112 = vmatprep.subr.mxu0 0.0
    %2113 = vmatpush2.msra.mxu0 0.0
    %2114 = vmatprep.subr.mxu0 0.0
    %2115 = vmatpush2.msra.mxu0 0.0
    %2116 = vmatprep.subr.mxu0 0.0
    %2117 = vmatpush2.msra.mxu0 0.0
    %2118 = vmatprep.subr.mxu0 0.0
    %2119 = vmatpush2.msra.mxu0 0.0
    %2120 = vmatprep.subr.mxu0 0.0
    %2121 = vmatpush2.msra.mxu0 0.0
    %2122 = vmatprep.subr.mxu0 0.0
    %2123 = vmatpush2.msra.mxu0 0.0
    %2124 = vmatprep.subr.mxu0 0.0
    %2125 = vmatpush2.msra.mxu0 0.0
    %2126 = vmatprep.subr.mxu0 0.0
    %2127 = vmatpush2.msra.mxu0 0.0
    %2128 = vmatprep.subr.mxu0 0.0
    %2129 = vmatpush2.msra.mxu0 0.0
    %2130 = vmatprep.mubr.f32.mxu0 0.0
    %2131 = vmatmul.mubr.f32.gmra.mxu0 %v2034
    %v2132 = vpop.f32.mrf.mxu0
    %v2133 = vadd.f32 %v2064, %v2132
    %v2134 = vpop.f32.mrf.mxu0
    %2135 = vmatprep.mubr.f32.mxu0 0.0
    %2136 = vmatmul.mubr.f32.gmra.mxu0 %v2035
    %v2137 = vpop.f32.mrf.mxu0
    %v2138 = vadd.f32 %v2064, %v2137
    %v2139 = vpop.f32.mrf.mxu0
    %2140 = vdwg.mxu0
    %v2141 = vxor.u32 %v2133, 2147483648
    %v2142 = vxor.u32 %v2138, 2147483648
    %v2143 = vmul.f32 %v2141, 1.442695
    %v2144 = vpow.pop %v2143
    %v2145 = vmul.f32 %v2142, 1.442695
    %v2146 = vpow.pop %v2145
    %v2147 = vadd.f32 %v2144, 1.0
    %v2148 = vadd.f32 %v2146, 1.0
    %v2149 = vrcp.pop %v2147
    %v2150 = vmul.f32 1.0, %v2149
    %v2151 = vrcp.pop %v2148
    %v2152 = vmul.f32 1.0, %v2151
    %vm2153 = vcmask 31744
    %2154 = vst.msk [vmem:[%s6] sm:$0xff] %vm2153, %v2150
    %2155 = vst.msk [vmem:[%s6 + $0x8] sm:$0xff] %vm2153, %v2152
  $region93: #{candle_lstm_forward.1} parent=0 // pred_fallthru
    _
  // Predicated region
  $region94: #{candle_lstm_forward.1} parent=0 // pred_check
    _
  $region95: #{candle_lstm_forward.1} parent=0 // pred_check_branch
    %2157 = sbr.rel (0) target = $region97
  $region96: #{candle_lstm_forward.1} parent=0 // pred_region
    _
  $region97: #{candle_lstm_forward.1} parent=0 // pred_fallthru
    _
  // Predicated region
  $region98: #{candle_lstm_forward.1} parent=0 // pred_check
    _
  $region99: #{candle_lstm_forward.1} parent=0 // pred_check_branch
    %2159 = sbr.rel (0) target = $region101
  $region100: #{candle_lstm_forward.1} parent=0 // pred_region
    _
  $region101: #{candle_lstm_forward.1} parent=0 // pred_fallthru
    _
  %2160 = vsyncmov [#allocation7]
  %s2161 = vpop.sfrf %2160
  %p2162 = scmp.eq.s32.totalorder %s2161, 0
  %p2163 = pneg %p2162
  %2165 = shalt.err (%p2163)
  %s2166 = scalar_lea.sflag [#allocation7], 1
  %2167 = vsyncmov %s2166
  %s2168 = vpop.sfrf %2167
  %p2169 = scmp.eq.s32.totalorder %s2168, 0
  %p2170 = pneg %p2169
  %2172 = shalt.err (%p2170)

</llo_original>
